<compile_context>
chip_gen: v7x
topology: tpu7x:2x2x1
jax: 0.10.0
libtpu: 0.0.40
codegen_flags: <defaults>
</compile_context>

<pallas_src>
import functools
import math

import jax
import jax.numpy as jnp
from jax.experimental import pallas as pl
from jax.experimental.pallas import tpu as pltpu


H = 56        # LSTM hidden size
HP = 128      # lane-aligned hidden / gate-slot width
OUTP = 128    # lane-dense padded fc2 output width (real logits in lanes 0..1)
EPS = 1e-5    # BatchNorm eps


# ----------------------------------------------------------------------------
# Kernel 1: Conv1d(1 -> C1, K) + bias + in-kernel BN batch stats + ReLU +
#           MaxPool1d(2).  Whole batch per call; Cin == 1 so the conv is K
#           lane-broadcast VPU multiply-adds (no MXU, no input padding).
# ----------------------------------------------------------------------------
def conv1_bn_pool_kernel(x_ref, w_ref, b_ref, g_ref, be_ref, o_ref, *, n, l, k, c):
    lo = l - k + 1
    lp = lo // 2
    x = x_ref[...]                                       # (n, l, 1)  f32
    w = w_ref[...]                                       # (k, 1, c)  f32
    acc = jnp.zeros((n, lo, c), jnp.float32)
    for t in range(k):                                   # static taps, VPU broadcast FMA
        acc = acc + x[:, t:t + lo, :] * w[t]             # (n,lo,1)*(1,c) -> (n,lo,c)
    y = (acc + b_ref[...]).reshape(n * lo, c)            # conv + bias, rows n-major

    # BN batch statistics (train mode, biased variance), computed in-kernel.
    cnt = float(n * lo)
    s1 = jnp.sum(y, axis=0, keepdims=True)
    s2 = jnp.sum(y * y, axis=0, keepdims=True)
    mean = s1 / cnt
    var = jnp.maximum(s2 / cnt - mean * mean, 0.0)
    scale = g_ref[...] * jax.lax.rsqrt(var + EPS)        # > 0 while gamma == 1
    shift = be_ref[...] - mean * scale

    # MaxPool1d(2), then BN affine + ReLU (order swap valid because scale > 0).
    pooled = jnp.max(y.reshape(n * lp, 2, c), axis=1)    # (n*lp, c)
    o_ref[...] = jnp.maximum(pooled * scale + shift, 0.0)


# ----------------------------------------------------------------------------
# Kernel 2: Conv1d(C1 -> C2, K) as ONE im2col-in-VMEM bf16 matmul + bias +
#           in-kernel BN batch stats + ReLU + MaxPool1d(2) + AdaptiveMaxPool1d(4).
# ----------------------------------------------------------------------------
def conv2_bn_pool_adaptive_kernel(x_ref, w_ref, b_ref, g_ref, be_ref, o_ref, *,
                                  n, lin, k, cin, c, n_adaptive):
    lo = lin - k + 1
    lp = lo // 2
    x = x_ref[...]                                       # (n*lin, cin) f32, rows n-major

    # im2col in VMEM: per sample, concat the k shifted (lo, cin) slices along lanes;
    # stack samples along rows -> one MXU pass of contraction depth k*cin.
    rows = []
    for s in range(n):
        base = s * lin
        cols = [x[base + t:base + t + lo, :] for t in range(k)]
        rows.append(jnp.concatenate(cols, axis=1))       # (lo, k*cin)
    im2col = jnp.concatenate(rows, axis=0)               # (n*lo, k*cin)

    y = jnp.dot(im2col.astype(jnp.bfloat16), w_ref[...],          # bf16 MXU, f32 acc
                preferred_element_type=jnp.float32) + b_ref[...]  # (n*lo, c)

    cnt = float(n * lo)
    s1 = jnp.sum(y, axis=0, keepdims=True)
    s2 = jnp.sum(y * y, axis=0, keepdims=True)
    mean = s1 / cnt
    var = jnp.maximum(s2 / cnt - mean * mean, 0.0)
    scale = g_ref[...] * jax.lax.rsqrt(var + EPS)        # > 0 while gamma == 1
    shift = be_ref[...] - mean * scale

    pooled = jnp.maximum(
        jnp.max(y.reshape(n * lp, 2, c), axis=1) * scale + shift, 0.0)   # (n*lp, c)

    # AdaptiveMaxPool1d(n_adaptive), PyTorch window bounds; build the whole
    # (n*n_adaptive, c) result and store once (no masked partial stores).
    pieces = []
    for s in range(n):
        for i in range(n_adaptive):
            w0 = (i * lp) // n_adaptive
            w1 = -((-(i + 1) * lp) // n_adaptive)        # ceil((i+1)*lp/n_adaptive)
            pieces.append(jnp.max(pooled[s * lp + w0:s * lp + w1, :],
                                  axis=0, keepdims=True))
    o_ref[...] = jnp.concatenate(pieces, axis=0)         # (n*n_adaptive, c)


# ----------------------------------------------------------------------------
# Kernel 3: LSTM (unbatched, lane-aligned 128-wide gate slots) + fc1 + fc2.
# ----------------------------------------------------------------------------
def lstm_fc_kernel(x_ref, wih_ref, whh_ref, b_ref, w1_ref, b1_ref, w2_ref, b2_ref,
                   out_ref, xg_ref, hseq_ref, *, seq_len, hp):
    # Input-gate projections for all timesteps at once (bf16 MXU, f32 accumulate).
    xg_ref[...] = jnp.dot(x_ref[...].astype(jnp.bfloat16), wih_ref[...],
                          preferred_element_type=jnp.float32) + b_ref[...]
    whh = whh_ref[...]        # (hp, 4*hp) bf16, hoisted: resident across the time loop
    # TODO(synk): hold whh stationary in the MXU (matmul_push_rhs/acc_lhs/pop) once
    # seq_len (= batch) grows enough for the per-step RHS push latency to matter.

    def step(t, carry):
        h, cc = carry                                    # (1, hp) f32; padded lanes stay 0
        gates = xg_ref[pl.ds(t, 1), :] + jnp.dot(
            h.astype(jnp.bfloat16), whh, preferred_element_type=jnp.float32)
        i_g = jax.nn.sigmoid(gates[:, 0 * hp:1 * hp])
        f_g = jax.nn.sigmoid(gates[:, 1 * hp:2 * hp])
        g_g = jnp.tanh(gates[:, 2 * hp:3 * hp])
        o_g = jax.nn.sigmoid(gates[:, 3 * hp:4 * hp])
        c_n = f_g * cc + i_g * g_g
        h_n = o_g * jnp.tanh(c_n)
        hseq_ref[pl.ds(t, 1), :] = h_n                   # VMEM scratch, no HBM round-trip
        return (h_n, c_n)

    zero = jnp.zeros((1, hp), jnp.float32)
    jax.lax.fori_loop(0, seq_len, step, (zero, zero), unroll=min(8, seq_len))

    # fc1 -> fc2 on the whole hidden sequence; lane-dense padded output slab.
    h_all = hseq_ref[...].astype(jnp.bfloat16)                               # (T, hp)
    f1 = jnp.dot(h_all, w1_ref[...], preferred_element_type=jnp.float32) + b1_ref[...]
    out_ref[...] = jnp.dot(f1.astype(jnp.bfloat16), w2_ref[...],
                           preferred_element_type=jnp.float32) + b2_ref[...]


# ----------------------------------------------------------------------------
# Parameter init (PyTorch-style shapes) and one-time kernel-layout prep
# ----------------------------------------------------------------------------
def init_params(key):
    ks = jax.random.split(key, 12)

    def unif(k, shape, fan_in):
        bound = 1.0 / math.sqrt(fan_in)
        return jax.random.uniform(k, shape, jnp.float32, -bound, bound)

    return {
        "conv1_w": unif(ks[0], (128, 1, 9), 1 * 9),
        "conv1_b": unif(ks[1], (128,), 1 * 9),
        "bn1_g": jnp.ones((128,), jnp.float32),
        "bn1_b": jnp.zeros((128,), jnp.float32),
        "conv2_w": unif(ks[2], (256, 128, 9), 128 * 9),
        "conv2_b": unif(ks[3], (256,), 128 * 9),
        "bn2_g": jnp.ones((256,), jnp.float32),
        "bn2_b": jnp.zeros((256,), jnp.float32),
        "lstm_w_ih": unif(ks[4], (4 * H, 1024), H),
        "lstm_w_hh": unif(ks[5], (4 * H, H), H),
        "lstm_b_ih": unif(ks[6], (4 * H,), H),
        "lstm_b_hh": unif(ks[7], (4 * H,), H),
        "fc1_w": unif(ks[8], (512, H), H),
        "fc1_b": unif(ks[9], (512,), H),
        "fc2_w": unif(ks[10], (2, 512), 512),
        "fc2_b": unif(ks[11], (2,), 512),
    }


def prepare_params(p):
    """One-time re-layout of PyTorch-style parameters for the fused kernels."""
    c1 = p["conv1_w"].shape[0]
    c2, cin2, k2 = p["conv2_w"].shape

    # conv1: (Cout,1,K) -> (K,1,Cout), f32 (VPU broadcast path).
    w1 = jnp.transpose(p["conv1_w"], (2, 1, 0)).astype(jnp.float32)
    # conv2: (Cout,Cin,K) -> (K,Cin,Cout) -> (K*Cin,Cout), bf16 (im2col MXU path);
    # column order matches the in-kernel im2col (tap-major, cin-minor).
    w2 = jnp.transpose(p["conv2_w"], (2, 1, 0)).reshape(k2 * cin2, c2).astype(jnp.bfloat16)

    # PyTorch flattens the adaptive output (N, C, 4) as feature j = c*4 + i; our
    # kernels produce (N, 4, C) flattened as f = i*C + c -> permute W_ih's columns
    # once so no runtime data transpose is needed.
    d_in = p["lstm_w_ih"].shape[1]
    f = jnp.arange(d_in)
    w_ih = p["lstm_w_ih"][:, (f % c2) * 4 + (f // c2)]

    # Gate-slot padding: gate g occupies lanes [g*HP, g*HP+H) of 4*HP = 512.
    wih_p = jnp.zeros((d_in, 4 * HP), jnp.float32)
    whh_p = jnp.zeros((HP, 4 * HP), jnp.float32)
    b_p = jnp.zeros((1, 4 * HP), jnp.float32)
    bsum = p["lstm_b_ih"] + p["lstm_b_hh"]
    for g in range(4):
        wih_p = wih_p.at[:, g * HP:g * HP + H].set(w_ih[g * H:(g + 1) * H, :].T)
        whh_p = whh_p.at[:H, g * HP:g * HP + H].set(
            p["lstm_w_hh"][g * H:(g + 1) * H, :].T)
        b_p = b_p.at[:, g * HP:g * HP + H].set(bsum[g * H:(g + 1) * H])

    w_fc1 = jnp.zeros((HP, 512), jnp.float32).at[:H, :].set(p["fc1_w"].T)
    w_fc2 = jnp.zeros((512, OUTP), jnp.float32).at[:, :2].set(p["fc2_w"].T)
    b_fc2 = jnp.zeros((1, OUTP), jnp.float32).at[:, :2].set(p["fc2_b"])

    return {
        "conv1_w": w1,
        "conv1_b": p["conv1_b"].reshape(1, c1),
        "bn1_g": p["bn1_g"].reshape(1, c1),
        "bn1_b": p["bn1_b"].reshape(1, c1),
        "conv2_w": w2,
        "conv2_b": p["conv2_b"].reshape(1, c2),
        "bn2_g": p["bn2_g"].reshape(1, c2),
        "bn2_b": p["bn2_b"].reshape(1, c2),
        "lstm_wih": wih_p.astype(jnp.bfloat16),
        "lstm_whh": whh_p.astype(jnp.bfloat16),
        "lstm_b": b_p,
        "fc1_w": w_fc1.astype(jnp.bfloat16),
        "fc1_b": p["fc1_b"].reshape(1, 512),
        "fc2_w": w_fc2.astype(jnp.bfloat16),
        "fc2_b": b_fc2,
    }


# ----------------------------------------------------------------------------
# Forward pass
# ----------------------------------------------------------------------------
def convnet_forward(x_ncl, kp):
    """x_ncl: (N, 1, L) like PyTorch.  Returns logits (N, 2)."""
    n, _, l = x_ncl.shape
    k1, _, c1 = kp["conv1_w"].shape
    c2 = kp["conv2_w"].shape[1]
    k2 = kp["conv2_w"].shape[0] // c1
    lo1 = l - k1 + 1
    lp1 = lo1 // 2
    lo2 = lp1 - k2 + 1
    assert lo1 % 2 == 0 and lo2 % 2 == 0, "MaxPool1d(2) with odd length not handled"
    n_adapt = 4

    x = jnp.transpose(x_ncl, (0, 2, 1)).astype(jnp.float32)      # (N, L, 1)

    # layer1: Conv1d(1,128,9) + BN(batch stats) + ReLU + MaxPool(2), fused, whole batch.
    y1 = pl.pallas_call(
        functools.partial(conv1_bn_pool_kernel, n=n, l=l, k=k1, c=c1),
        out_shape=jax.ShapeDtypeStruct((n * lp1, c1), jnp.float32),
    )(x, kp["conv1_w"], kp["conv1_b"], kp["bn1_g"], kp["bn1_b"])

    # layer2 + adaptive: Conv1d(128,256,9) + BN + ReLU + MaxPool(2) + AdaptiveMaxPool(4).
    ap = pl.pallas_call(
        functools.partial(conv2_bn_pool_adaptive_kernel, n=n, lin=lp1, k=k2,
                          cin=c1, c=c2, n_adaptive=n_adapt),
        out_shape=jax.ShapeDtypeStruct((n * n_adapt, c2), jnp.float32),
    )(y1, kp["conv2_w"], kp["conv2_b"], kp["bn2_g"], kp["bn2_b"])

    # contiguous flatten (feature order i*C2 + c; W_ih columns were pre-permuted).
    flat = ap.reshape(n, n_adapt * c2)                            # (N, 1024)

    # LSTM(1024,56) on 2-D input (unbatched, seq_len = N), fused with fc1 and fc2.
    # TODO(synk): for large N, tile T / split the time-parallel projections across
    # v7x's two TensorCores and set vmem_limit_bytes; at these sizes everything
    # fits the default scoped VMEM on v5e/v6e/v7x.
    out_pad = pl.pallas_call(
        functools.partial(lstm_fc_kernel, seq_len=n, hp=HP),
        out_shape=jax.ShapeDtypeStruct((n, OUTP), jnp.float32),
        scratch_shapes=[pltpu.VMEM((n, 4 * HP), jnp.float32),     # gate projections
                        pltpu.VMEM((n, HP), jnp.float32)],        # hidden sequence
    )(flat, kp["lstm_wih"], kp["lstm_whh"], kp["lstm_b"],
      kp["fc1_w"], kp["fc1_b"], kp["fc2_w"], kp["fc2_b"])
    return out_pad[:, :2]


if __name__ == "__main__":
    key = jax.random.PRNGKey(0)
    kx, kparam = jax.random.split(key)
    # batch=2, 1 input channel, length 64:
    # 64 -> conv 56 -> pool 28 -> conv 20 -> pool 10 -> adaptive 4 -> 1024 feats
    x = jax.random.normal(kx, (2, 1, 64), jnp.float32)
    params = prepare_params(init_params(kparam))

    out = convnet_forward(x, params)
    out = jax.block_until_ready(out)
    assert out.shape == (2, 2), out.shape
    assert bool(jnp.all(jnp.isfinite(out)))
    print("KERNEL_OK")
</pallas_src>

<mosaic_0001>
module attributes {stable_mosaic.version = 11 : i64} {
  func.func @conv1_bn_pool_kernel(%arg0: memref<2x64x1xf32, #tpu.memory_space<vmem>>, %arg1: memref<9x1x128xf32, #tpu.memory_space<vmem>>, %arg2: memref<1x128xf32, #tpu.memory_space<vmem>>, %arg3: memref<1x128xf32, #tpu.memory_space<vmem>>, %arg4: memref<1x128xf32, #tpu.memory_space<vmem>>, %arg5: memref<56x128xf32, #tpu.memory_space<vmem>>) attributes {dimension_semantics = [], scalar_prefetch = 0 : i64, scratch_operands = 0 : i64, tpu.core_type = #tpu.core_type<tc>} {
    %c0 = arith.constant 0 : index
    %c0_0 = arith.constant 0 : index
    %c0_1 = arith.constant 0 : index
    %0 = vector.load %arg0[%c0, %c0_0, %c0_1] : memref<2x64x1xf32, #tpu.memory_space<vmem>>, vector<2x64x1xf32>
    %c0_2 = arith.constant 0 : index
    %c0_3 = arith.constant 0 : index
    %c0_4 = arith.constant 0 : index
    %1 = vector.load %arg1[%c0_2, %c0_3, %c0_4] : memref<9x1x128xf32, #tpu.memory_space<vmem>>, vector<9x1x128xf32>
    %cst = arith.constant 0.000000e+00 : f32
    %2 = vector.broadcast %cst : f32 to vector<2x56x128xf32>
    %3 = vector.extract_strided_slice %0 {offsets = [0, 0, 0], sizes = [2, 56, 1], strides = [1, 1, 1]} : vector<2x64x1xf32> to vector<2x56x1xf32>
    %4 = vector.extract_strided_slice %1 {offsets = [0, 0, 0], sizes = [1, 1, 128], strides = [1, 1, 1]} : vector<9x1x128xf32> to vector<1x1x128xf32>
    %5 = vector.shape_cast %4 : vector<1x1x128xf32> to vector<1x128xf32>
    %6 = vector.shape_cast %5 : vector<1x128xf32> to vector<1x1x128xf32>
    %7 = vector.broadcast %3 : vector<2x56x1xf32> to vector<2x56x128xf32>
    %8 = vector.broadcast %6 : vector<1x1x128xf32> to vector<2x56x128xf32>
    %9 = arith.mulf %7, %8 : vector<2x56x128xf32>
    %10 = arith.addf %2, %9 : vector<2x56x128xf32>
    %11 = vector.extract_strided_slice %0 {offsets = [0, 1, 0], sizes = [2, 56, 1], strides = [1, 1, 1]} : vector<2x64x1xf32> to vector<2x56x1xf32>
    %12 = vector.extract_strided_slice %1 {offsets = [1, 0, 0], sizes = [1, 1, 128], strides = [1, 1, 1]} : vector<9x1x128xf32> to vector<1x1x128xf32>
    %13 = vector.shape_cast %12 : vector<1x1x128xf32> to vector<1x128xf32>
    %14 = vector.shape_cast %13 : vector<1x128xf32> to vector<1x1x128xf32>
    %15 = vector.broadcast %11 : vector<2x56x1xf32> to vector<2x56x128xf32>
    %16 = vector.broadcast %14 : vector<1x1x128xf32> to vector<2x56x128xf32>
    %17 = arith.mulf %15, %16 : vector<2x56x128xf32>
    %18 = arith.addf %10, %17 : vector<2x56x128xf32>
    %19 = vector.extract_strided_slice %0 {offsets = [0, 2, 0], sizes = [2, 56, 1], strides = [1, 1, 1]} : vector<2x64x1xf32> to vector<2x56x1xf32>
    %20 = vector.extract_strided_slice %1 {offsets = [2, 0, 0], sizes = [1, 1, 128], strides = [1, 1, 1]} : vector<9x1x128xf32> to vector<1x1x128xf32>
    %21 = vector.shape_cast %20 : vector<1x1x128xf32> to vector<1x128xf32>
    %22 = vector.shape_cast %21 : vector<1x128xf32> to vector<1x1x128xf32>
    %23 = vector.broadcast %19 : vector<2x56x1xf32> to vector<2x56x128xf32>
    %24 = vector.broadcast %22 : vector<1x1x128xf32> to vector<2x56x128xf32>
    %25 = arith.mulf %23, %24 : vector<2x56x128xf32>
    %26 = arith.addf %18, %25 : vector<2x56x128xf32>
    %27 = vector.extract_strided_slice %0 {offsets = [0, 3, 0], sizes = [2, 56, 1], strides = [1, 1, 1]} : vector<2x64x1xf32> to vector<2x56x1xf32>
    %28 = vector.extract_strided_slice %1 {offsets = [3, 0, 0], sizes = [1, 1, 128], strides = [1, 1, 1]} : vector<9x1x128xf32> to vector<1x1x128xf32>
    %29 = vector.shape_cast %28 : vector<1x1x128xf32> to vector<1x128xf32>
    %30 = vector.shape_cast %29 : vector<1x128xf32> to vector<1x1x128xf32>
    %31 = vector.broadcast %27 : vector<2x56x1xf32> to vector<2x56x128xf32>
    %32 = vector.broadcast %30 : vector<1x1x128xf32> to vector<2x56x128xf32>
    %33 = arith.mulf %31, %32 : vector<2x56x128xf32>
    %34 = arith.addf %26, %33 : vector<2x56x128xf32>
    %35 = vector.extract_strided_slice %0 {offsets = [0, 4, 0], sizes = [2, 56, 1], strides = [1, 1, 1]} : vector<2x64x1xf32> to vector<2x56x1xf32>
    %36 = vector.extract_strided_slice %1 {offsets = [4, 0, 0], sizes = [1, 1, 128], strides = [1, 1, 1]} : vector<9x1x128xf32> to vector<1x1x128xf32>
    %37 = vector.shape_cast %36 : vector<1x1x128xf32> to vector<1x128xf32>
    %38 = vector.shape_cast %37 : vector<1x128xf32> to vector<1x1x128xf32>
    %39 = vector.broadcast %35 : vector<2x56x1xf32> to vector<2x56x128xf32>
    %40 = vector.broadcast %38 : vector<1x1x128xf32> to vector<2x56x128xf32>
    %41 = arith.mulf %39, %40 : vector<2x56x128xf32>
    %42 = arith.addf %34, %41 : vector<2x56x128xf32>
    %43 = vector.extract_strided_slice %0 {offsets = [0, 5, 0], sizes = [2, 56, 1], strides = [1, 1, 1]} : vector<2x64x1xf32> to vector<2x56x1xf32>
    %44 = vector.extract_strided_slice %1 {offsets = [5, 0, 0], sizes = [1, 1, 128], strides = [1, 1, 1]} : vector<9x1x128xf32> to vector<1x1x128xf32>
    %45 = vector.shape_cast %44 : vector<1x1x128xf32> to vector<1x128xf32>
    %46 = vector.shape_cast %45 : vector<1x128xf32> to vector<1x1x128xf32>
    %47 = vector.broadcast %43 : vector<2x56x1xf32> to vector<2x56x128xf32>
    %48 = vector.broadcast %46 : vector<1x1x128xf32> to vector<2x56x128xf32>
    %49 = arith.mulf %47, %48 : vector<2x56x128xf32>
    %50 = arith.addf %42, %49 : vector<2x56x128xf32>
    %51 = vector.extract_strided_slice %0 {offsets = [0, 6, 0], sizes = [2, 56, 1], strides = [1, 1, 1]} : vector<2x64x1xf32> to vector<2x56x1xf32>
    %52 = vector.extract_strided_slice %1 {offsets = [6, 0, 0], sizes = [1, 1, 128], strides = [1, 1, 1]} : vector<9x1x128xf32> to vector<1x1x128xf32>
    %53 = vector.shape_cast %52 : vector<1x1x128xf32> to vector<1x128xf32>
    %54 = vector.shape_cast %53 : vector<1x128xf32> to vector<1x1x128xf32>
    %55 = vector.broadcast %51 : vector<2x56x1xf32> to vector<2x56x128xf32>
    %56 = vector.broadcast %54 : vector<1x1x128xf32> to vector<2x56x128xf32>
    %57 = arith.mulf %55, %56 : vector<2x56x128xf32>
    %58 = arith.addf %50, %57 : vector<2x56x128xf32>
    %59 = vector.extract_strided_slice %0 {offsets = [0, 7, 0], sizes = [2, 56, 1], strides = [1, 1, 1]} : vector<2x64x1xf32> to vector<2x56x1xf32>
    %60 = vector.extract_strided_slice %1 {offsets = [7, 0, 0], sizes = [1, 1, 128], strides = [1, 1, 1]} : vector<9x1x128xf32> to vector<1x1x128xf32>
    %61 = vector.shape_cast %60 : vector<1x1x128xf32> to vector<1x128xf32>
    %62 = vector.shape_cast %61 : vector<1x128xf32> to vector<1x1x128xf32>
    %63 = vector.broadcast %59 : vector<2x56x1xf32> to vector<2x56x128xf32>
    %64 = vector.broadcast %62 : vector<1x1x128xf32> to vector<2x56x128xf32>
    %65 = arith.mulf %63, %64 : vector<2x56x128xf32>
    %66 = arith.addf %58, %65 : vector<2x56x128xf32>
    %67 = vector.extract_strided_slice %0 {offsets = [0, 8, 0], sizes = [2, 56, 1], strides = [1, 1, 1]} : vector<2x64x1xf32> to vector<2x56x1xf32>
    %68 = vector.extract_strided_slice %1 {offsets = [8, 0, 0], sizes = [1, 1, 128], strides = [1, 1, 1]} : vector<9x1x128xf32> to vector<1x1x128xf32>
    %69 = vector.shape_cast %68 : vector<1x1x128xf32> to vector<1x128xf32>
    %70 = vector.shape_cast %69 : vector<1x128xf32> to vector<1x1x128xf32>
    %71 = vector.broadcast %67 : vector<2x56x1xf32> to vector<2x56x128xf32>
    %72 = vector.broadcast %70 : vector<1x1x128xf32> to vector<2x56x128xf32>
    %73 = arith.mulf %71, %72 : vector<2x56x128xf32>
    %74 = arith.addf %66, %73 : vector<2x56x128xf32>
    %c0_5 = arith.constant 0 : index
    %c0_6 = arith.constant 0 : index
    %75 = vector.load %arg2[%c0_5, %c0_6] : memref<1x128xf32, #tpu.memory_space<vmem>>, vector<1x128xf32>
    %76 = vector.shape_cast %75 : vector<1x128xf32> to vector<1x1x128xf32>
    %77 = vector.broadcast %76 : vector<1x1x128xf32> to vector<2x56x128xf32>
    %78 = arith.addf %74, %77 : vector<2x56x128xf32>
    %79 = vector.shape_cast %78 : vector<2x56x128xf32> to vector<112x128xf32>
    %cst_7 = arith.constant dense<0.000000e+00> : vector<128xf32>
    %80 = vector.multi_reduction <add>, %79, %cst_7 [0] : vector<112x128xf32> to vector<128xf32>
    %81 = vector.shape_cast %80 : vector<128xf32> to vector<1x128xf32>
    %82 = arith.mulf %79, %79 : vector<112x128xf32>
    %cst_8 = arith.constant dense<0.000000e+00> : vector<128xf32>
    %83 = vector.multi_reduction <add>, %82, %cst_8 [0] : vector<112x128xf32> to vector<128xf32>
    %84 = vector.shape_cast %83 : vector<128xf32> to vector<1x128xf32>
    %cst_9 = arith.constant 1.120000e+02 : f32
    %85 = vector.broadcast %cst_9 : f32 to vector<1x128xf32>
    %86 = arith.divf %81, %85 : vector<1x128xf32>
    %cst_10 = arith.constant 1.120000e+02 : f32
    %87 = vector.broadcast %cst_10 : f32 to vector<1x128xf32>
    %88 = arith.divf %84, %87 : vector<1x128xf32>
    %89 = arith.mulf %86, %86 : vector<1x128xf32>
    %90 = arith.subf %88, %89 : vector<1x128xf32>
    %cst_11 = arith.constant 0.000000e+00 : f32
    %91 = vector.broadcast %cst_11 : f32 to vector<1x128xf32>
    %92 = arith.maximumf %90, %91 : vector<1x128xf32>
    %c0_12 = arith.constant 0 : index
    %c0_13 = arith.constant 0 : index
    %93 = vector.load %arg3[%c0_12, %c0_13] : memref<1x128xf32, #tpu.memory_space<vmem>>, vector<1x128xf32>
    %cst_14 = arith.constant 9.99999974E-6 : f32
    %94 = vector.broadcast %cst_14 : f32 to vector<1x128xf32>
    %95 = arith.addf %92, %94 : vector<1x128xf32>
    %96 = math.rsqrt %95 : vector<1x128xf32>
    %97 = arith.mulf %93, %96 : vector<1x128xf32>
    %c0_15 = arith.constant 0 : index
    %c0_16 = arith.constant 0 : index
    %98 = vector.load %arg4[%c0_15, %c0_16] : memref<1x128xf32, #tpu.memory_space<vmem>>, vector<1x128xf32>
    %99 = arith.mulf %86, %97 : vector<1x128xf32>
    %100 = arith.subf %98, %99 : vector<1x128xf32>
    %101 = vector.shape_cast %79 : vector<112x128xf32> to vector<56x2x128xf32>
    %cst_17 = arith.constant dense<0xFF800000> : vector<56x128xf32>
    %102 = vector.multi_reduction <maximumf>, %101, %cst_17 [1] : vector<56x2x128xf32> to vector<56x128xf32>
    %103 = vector.broadcast %97 : vector<1x128xf32> to vector<56x128xf32>
    %104 = arith.mulf %102, %103 : vector<56x128xf32>
    %105 = vector.broadcast %100 : vector<1x128xf32> to vector<56x128xf32>
    %106 = arith.addf %104, %105 : vector<56x128xf32>
    %cst_18 = arith.constant 0.000000e+00 : f32
    %107 = vector.broadcast %cst_18 : f32 to vector<56x128xf32>
    %108 = arith.maximumf %106, %107 : vector<56x128xf32>
    %c0_19 = arith.constant 0 : index
    %c0_20 = arith.constant 0 : index
    %109 = vector.load %arg5[%c0_19, %c0_20] : memref<56x128xf32, #tpu.memory_space<vmem>>, vector<56x128xf32>
    tpu.vector_store %arg5[%c0_19, %c0_20], %108 {strides = array<i32>} : memref<56x128xf32, #tpu.memory_space<vmem>>, vector<56x128xf32>,
    return
  }
}

</mosaic_0001>

<llo_original>
// kernel: tpu_custom_call.1
$region0: #{tpu_custom_call.1}
  #allocation0 [shape = 'u32[]', space=smem, size = 0x4, offset = 0x4, fixed_abs, tag = 'smem constant byte address 0x4 - core index']
  #allocation1 [shape = 'u32[144,128]{1,0:T(1,128)}', space=vmem, size = 0x12000, scoped, tag = 'internal scratch']
  %s0 = inlined_call_operand.vmem [shape: f32[2,64,1], index: 0, kind: input, shape index: {}]
  %s1 = inlined_call_operand.vmem [shape: f32[9,1,128], index: 1, kind: input, shape index: {}]
  %s2 = inlined_call_operand.vmem [shape: f32[1,128], index: 2, kind: input, shape index: {}]
  %s3 = inlined_call_operand.vmem [shape: f32[1,128], index: 3, kind: input, shape index: {}]
  %s4 = inlined_call_operand.vmem [shape: f32[1,128], index: 4, kind: input, shape index: {}]
  %s5 = inlined_call_operand.hbm [shape: f32[56,128], index: 5, kind: output, shape index: {}]
  %s6 = sld [smem:[#allocation0]]
  $region30: #{tpu_custom_call.1} parent=0
    _
  %s8 = ssub.s32 1, %s6
  %s9 = scalar_select 0, %s8, %s6
  $region1: #{tpu_custom_call.1} parent=0
    #allocation2 [shape = 'u8[28672]{0}', space=vmem, size = 0x7000, scoped, tag = 'output window, operand 0, single buffered']
    #allocation3 [shape = 's32[1]{0}', space=sflag, size = 0x4, scoped, tag = 'scoped memory for tpu_custom_call.1']
    %10 = vsyncpa [#allocation3], 0
    // Predicated region
    $region2: #{tpu_custom_call.1} parent=1 // pred_check
      _
    $region3: #{tpu_custom_call.1} parent=1 // pred_check_branch
      %12 = sbr.rel (0) target = $region5
    $region4: #{tpu_custom_call.1} parent=1 // pred_region
      _
    $region5: #{tpu_custom_call.1} parent=1 // pred_fallthru
      _
    // Predicated region
    $region6: #{tpu_custom_call.1} parent=1 // pred_check
      _
    $region7: #{tpu_custom_call.1} parent=1 // pred_check_branch
      %14 = sbr.rel (0) target = $region9
    $region8: #{tpu_custom_call.1} parent=1 // pred_region
      _
    $region9: #{tpu_custom_call.1} parent=1 // pred_fallthru
      _
    // Predicated region
    $region10: #{tpu_custom_call.1} parent=1 // pred_check
      _
    $region11: #{tpu_custom_call.1} parent=1 // pred_check_branch
      %16 = sbr.rel (0) target = $region13
    $region12: #{tpu_custom_call.1} parent=1 // pred_region
      _
    $region13: #{tpu_custom_call.1} parent=1 // pred_fallthru
      _
    // Predicated region
    $region14: #{tpu_custom_call.1} parent=1 // pred_check
      _
    $region15: #{tpu_custom_call.1} parent=1 // pred_check_branch
      %18 = sbr.rel (0) target = $region17
    $region16: #{tpu_custom_call.1} parent=1 // pred_region
      _
    $region17: #{tpu_custom_call.1} parent=1 // pred_fallthru
      _
    // Predicated region
    $region18: #{tpu_custom_call.1} parent=1 // pred_check
      _
    $region19: #{tpu_custom_call.1} parent=1 // pred_check_branch
      %20 = sbr.rel (0) target = $region21
    $region20: #{tpu_custom_call.1} parent=1 // pred_region
      _
    $region21: #{tpu_custom_call.1} parent=1 // pred_fallthru
      _
    %v21 = vld [vmem:[%s0] sm:$0xff]
    %v22 = vld [vmem:[%s0 + $0x8] sm:$0xff]
    %v23 = vld [vmem:[%s0 + $0x10] sm:$0xff]
    %v24 = vld [vmem:[%s0 + $0x18] sm:$0xff]
    %v25 = vld [vmem:[%s0 + $0x20] sm:$0xff]
    %v26 = vld [vmem:[%s0 + $0x28] sm:$0xff]
    %v27 = vld [vmem:[%s0 + $0x30] sm:$0xff]
    %v28 = vld [vmem:[%s0 + $0x38] sm:$0xff]
    %v29 = vld [vmem:[%s0 + $0x40] sm:$0xff]
    %v30 = vld [vmem:[%s0 + $0x48] sm:$0xff]
    %v31 = vld [vmem:[%s0 + $0x50] sm:$0xff]
    %v32 = vld [vmem:[%s0 + $0x58] sm:$0xff]
    %v33 = vld [vmem:[%s0 + $0x60] sm:$0xff]
    %v34 = vld [vmem:[%s0 + $0x68] sm:$0xff]
    %v35 = vld [vmem:[%s0 + $0x70] sm:$0xff]
    %v36 = vld [vmem:[%s0 + $0x78] sm:$0xff]
    %v37 = vld [vmem:[%s1] sm:$0x1]
    %v38 = vld [vmem:[%s1 + $0x1] sm:$0x1]
    %v39 = vld [vmem:[%s1 + $0x2] sm:$0x1]
    %v40 = vld [vmem:[%s1 + $0x3] sm:$0x1]
    %v41 = vld [vmem:[%s1 + $0x4] sm:$0x1]
    %v42 = vld [vmem:[%s1 + $0x5] sm:$0x1]
    %v43 = vld [vmem:[%s1 + $0x6] sm:$0x1]
    %v44 = vld [vmem:[%s1 + $0x7] sm:$0x1]
    %v45 = vld [vmem:[%s1 + $0x8] sm:$0x1]
    %47 = vset.pattern.permute.xlu0 0
    %48 = vperm.xlu0 %47, %v21
    %v49 = vpop.permute.xlu0 %48
    %52 = vset.pattern.permute.xlu0 0
    %53 = vperm.xlu0 %52, %v22
    %v54 = vpop.permute.xlu0 %53
    %57 = vset.pattern.permute.xlu0 0
    %58 = vperm.xlu0 %57, %v23
    %v59 = vpop.permute.xlu0 %58
    %62 = vset.pattern.permute.xlu0 0
    %63 = vperm.xlu0 %62, %v24
    %v64 = vpop.permute.xlu0 %63
    %67 = vset.pattern.permute.xlu0 0
    %68 = vperm.xlu0 %67, %v25
    %v69 = vpop.permute.xlu0 %68
    %72 = vset.pattern.permute.xlu0 0
    %73 = vperm.xlu0 %72, %v26
    %v74 = vpop.permute.xlu0 %73
    %77 = vset.pattern.permute.xlu0 0
    %78 = vperm.xlu0 %77, %v27
    %v79 = vpop.permute.xlu0 %78
    %82 = vset.pattern.permute.xlu0 0
    %83 = vperm.xlu0 %82, %v29
    %v84 = vpop.permute.xlu0 %83
    %87 = vset.pattern.permute.xlu0 0
    %88 = vperm.xlu0 %87, %v30
    %v89 = vpop.permute.xlu0 %88
    %92 = vset.pattern.permute.xlu0 0
    %93 = vperm.xlu0 %92, %v31
    %v94 = vpop.permute.xlu0 %93
    %97 = vset.pattern.permute.xlu0 0
    %98 = vperm.xlu0 %97, %v32
    %v99 = vpop.permute.xlu0 %98
    %102 = vset.pattern.permute.xlu0 0
    %103 = vperm.xlu0 %102, %v33
    %v104 = vpop.permute.xlu0 %103
    %107 = vset.pattern.permute.xlu0 0
    %108 = vperm.xlu0 %107, %v34
    %v109 = vpop.permute.xlu0 %108
    %112 = vset.pattern.permute.xlu0 0
    %113 = vperm.xlu0 %112, %v35
    %v114 = vpop.permute.xlu0 %113
    %v117 = vlaneseq
    %v118 = vshrl.u32 %v117, 7
    %v119 = vsub.s32 0, %v118
    %v120 = vrot.slane %v37, %v119
    %v122 = vmul.f32 %v49, %v120
    %v123 = vmul.f32 %v54, %v120
    %v124 = vmul.f32 %v59, %v120
    %v125 = vmul.f32 %v64, %v120
    %v126 = vmul.f32 %v69, %v120
    %v127 = vmul.f32 %v74, %v120
    %v128 = vmul.f32 %v79, %v120
    %v129 = vmul.f32 %v84, %v120
    %v130 = vmul.f32 %v89, %v120
    %v131 = vmul.f32 %v94, %v120
    %v132 = vmul.f32 %v99, %v120
    %v133 = vmul.f32 %v104, %v120
    %v134 = vmul.f32 %v109, %v120
    %v135 = vmul.f32 %v114, %v120
    %v136 = vadd.f32 %v122, 0.0
    %v137 = vadd.f32 %v123, 0.0
    %v138 = vadd.f32 %v124, 0.0
    %v139 = vadd.f32 %v125, 0.0
    %v140 = vadd.f32 %v126, 0.0
    %v141 = vadd.f32 %v127, 0.0
    %v142 = vadd.f32 %v128, 0.0
    %v143 = vadd.f32 %v129, 0.0
    %v144 = vadd.f32 %v130, 0.0
    %v145 = vadd.f32 %v131, 0.0
    %v146 = vadd.f32 %v132, 0.0
    %v147 = vadd.f32 %v133, 0.0
    %v148 = vadd.f32 %v134, 0.0
    %v149 = vadd.f32 %v135, 0.0
    %151 = vset.pattern.permute.xlu0 0
    %152 = vperm.xlu0 %151, %v28
    %v153 = vpop.permute.xlu0 %152
    %156 = vset.pattern.permute.xlu0 0
    %157 = vperm.xlu0 %156, %v36
    %v158 = vpop.permute.xlu0 %157
    %v161 = vlaneseq
    %v162 = vshrl.u32 %v161, 7
    %v163 = vsub.s32 0, %v162
    %v164 = vrot.slane %v38, %v163
    %v166 = vmul.f32 %v49, %v164
    %v167 = vmul.f32 %v54, %v164
    %v168 = vmul.f32 %v59, %v164
    %v169 = vmul.f32 %v64, %v164
    %v170 = vmul.f32 %v69, %v164
    %v171 = vmul.f32 %v74, %v164
    %v172 = vmul.f32 %v79, %v164
    %v173 = vmul.f32 %v153, %v164
    %v174 = vmul.f32 %v84, %v164
    %v175 = vmul.f32 %v89, %v164
    %v176 = vmul.f32 %v94, %v164
    %v177 = vmul.f32 %v99, %v164
    %v178 = vmul.f32 %v104, %v164
    %v179 = vmul.f32 %v109, %v164
    %v180 = vmul.f32 %v114, %v164
    %v181 = vmul.f32 %v158, %v164
    %vm198 = vcmask 1046528
    %v199 = vrot.slane %v166, 1
    %v200 = vrot.slane %v167, 1
    %v201 = vsel %vm198, %v199, %v200
    %v202 = vrot.slane %v168, 1
    %v203 = vsel %vm198, %v200, %v202
    %v204 = vrot.slane %v169, 1
    %v205 = vsel %vm198, %v202, %v204
    %v206 = vrot.slane %v170, 1
    %v207 = vsel %vm198, %v204, %v206
    %v208 = vrot.slane %v171, 1
    %v209 = vsel %vm198, %v206, %v208
    %v210 = vrot.slane %v172, 1
    %v211 = vsel %vm198, %v208, %v210
    %v212 = vrot.slane %v173, 1
    %v213 = vsel %vm198, %v210, %v212
    %v214 = vrot.slane %v174, 1
    %v215 = vrot.slane %v175, 1
    %v216 = vsel %vm198, %v214, %v215
    %v217 = vrot.slane %v176, 1
    %v218 = vsel %vm198, %v215, %v217
    %v219 = vrot.slane %v177, 1
    %v220 = vsel %vm198, %v217, %v219
    %v221 = vrot.slane %v178, 1
    %v222 = vsel %vm198, %v219, %v221
    %v223 = vrot.slane %v179, 1
    %v224 = vsel %vm198, %v221, %v223
    %v225 = vrot.slane %v180, 1
    %v226 = vsel %vm198, %v223, %v225
    %v227 = vrot.slane %v181, 1
    %v228 = vsel %vm198, %v225, %v227
    %v243 = vadd.f32 %v136, %v201
    %v244 = vadd.f32 %v137, %v203
    %v245 = vadd.f32 %v138, %v205
    %v246 = vadd.f32 %v139, %v207
    %v247 = vadd.f32 %v140, %v209
    %v248 = vadd.f32 %v141, %v211
    %v249 = vadd.f32 %v142, %v213
    %v250 = vadd.f32 %v143, %v216
    %v251 = vadd.f32 %v144, %v218
    %v252 = vadd.f32 %v145, %v220
    %v253 = vadd.f32 %v146, %v222
    %v254 = vadd.f32 %v147, %v224
    %v255 = vadd.f32 %v148, %v226
    %v256 = vadd.f32 %v149, %v228
    %v258 = vlaneseq
    %v259 = vshrl.u32 %v258, 7
    %v260 = vsub.s32 0, %v259
    %v261 = vrot.slane %v39, %v260
    %v263 = vmul.f32 %v49, %v261
    %v264 = vmul.f32 %v54, %v261
    %v265 = vmul.f32 %v59, %v261
    %v266 = vmul.f32 %v64, %v261
    %v267 = vmul.f32 %v69, %v261
    %v268 = vmul.f32 %v74, %v261
    %v269 = vmul.f32 %v79, %v261
    %v270 = vmul.f32 %v153, %v261
    %v271 = vmul.f32 %v84, %v261
    %v272 = vmul.f32 %v89, %v261
    %v273 = vmul.f32 %v94, %v261
    %v274 = vmul.f32 %v99, %v261
    %v275 = vmul.f32 %v104, %v261
    %v276 = vmul.f32 %v109, %v261
    %v277 = vmul.f32 %v114, %v261
    %v278 = vmul.f32 %v158, %v261
    %vm295 = vcmask 1045504
    %v296 = vrot.slane %v263, 2
    %v297 = vrot.slane %v264, 2
    %v298 = vsel %vm295, %v296, %v297
    %v299 = vrot.slane %v265, 2
    %v300 = vsel %vm295, %v297, %v299
    %v301 = vrot.slane %v266, 2
    %v302 = vsel %vm295, %v299, %v301
    %v303 = vrot.slane %v267, 2
    %v304 = vsel %vm295, %v301, %v303
    %v305 = vrot.slane %v268, 2
    %v306 = vsel %vm295, %v303, %v305
    %v307 = vrot.slane %v269, 2
    %v308 = vsel %vm295, %v305, %v307
    %v309 = vrot.slane %v270, 2
    %v310 = vsel %vm295, %v307, %v309
    %v311 = vrot.slane %v271, 2
    %v312 = vrot.slane %v272, 2
    %v313 = vsel %vm295, %v311, %v312
    %v314 = vrot.slane %v273, 2
    %v315 = vsel %vm295, %v312, %v314
    %v316 = vrot.slane %v274, 2
    %v317 = vsel %vm295, %v314, %v316
    %v318 = vrot.slane %v275, 2
    %v319 = vsel %vm295, %v316, %v318
    %v320 = vrot.slane %v276, 2
    %v321 = vsel %vm295, %v318, %v320
    %v322 = vrot.slane %v277, 2
    %v323 = vsel %vm295, %v320, %v322
    %v324 = vrot.slane %v278, 2
    %v325 = vsel %vm295, %v322, %v324
    %v340 = vadd.f32 %v243, %v298
    %v341 = vadd.f32 %v244, %v300
    %v342 = vadd.f32 %v245, %v302
    %v343 = vadd.f32 %v246, %v304
    %v344 = vadd.f32 %v247, %v306
    %v345 = vadd.f32 %v248, %v308
    %v346 = vadd.f32 %v249, %v310
    %v347 = vadd.f32 %v250, %v313
    %v348 = vadd.f32 %v251, %v315
    %v349 = vadd.f32 %v252, %v317
    %v350 = vadd.f32 %v253, %v319
    %v351 = vadd.f32 %v254, %v321
    %v352 = vadd.f32 %v255, %v323
    %v353 = vadd.f32 %v256, %v325
    %v355 = vlaneseq
    %v356 = vshrl.u32 %v355, 7
    %v357 = vsub.s32 0, %v356
    %v358 = vrot.slane %v40, %v357
    %v360 = vmul.f32 %v49, %v358
    %v361 = vmul.f32 %v54, %v358
    %v362 = vmul.f32 %v59, %v358
    %v363 = vmul.f32 %v64, %v358
    %v364 = vmul.f32 %v69, %v358
    %v365 = vmul.f32 %v74, %v358
    %v366 = vmul.f32 %v79, %v358
    %v367 = vmul.f32 %v153, %v358
    %v368 = vmul.f32 %v84, %v358
    %v369 = vmul.f32 %v89, %v358
    %v370 = vmul.f32 %v94, %v358
    %v371 = vmul.f32 %v99, %v358
    %v372 = vmul.f32 %v104, %v358
    %v373 = vmul.f32 %v109, %v358
    %v374 = vmul.f32 %v114, %v358
    %v375 = vmul.f32 %v158, %v358
    %vm392 = vcmask 1044480
    %v393 = vrot.slane %v360, 3
    %v394 = vrot.slane %v361, 3
    %v395 = vsel %vm392, %v393, %v394
    %v396 = vrot.slane %v362, 3
    %v397 = vsel %vm392, %v394, %v396
    %v398 = vrot.slane %v363, 3
    %v399 = vsel %vm392, %v396, %v398
    %v400 = vrot.slane %v364, 3
    %v401 = vsel %vm392, %v398, %v400
    %v402 = vrot.slane %v365, 3
    %v403 = vsel %vm392, %v400, %v402
    %v404 = vrot.slane %v366, 3
    %v405 = vsel %vm392, %v402, %v404
    %v406 = vrot.slane %v367, 3
    %v407 = vsel %vm392, %v404, %v406
    %v408 = vrot.slane %v368, 3
    %v409 = vrot.slane %v369, 3
    %v410 = vsel %vm392, %v408, %v409
    %v411 = vrot.slane %v370, 3
    %v412 = vsel %vm392, %v409, %v411
    %v413 = vrot.slane %v371, 3
    %v414 = vsel %vm392, %v411, %v413
    %v415 = vrot.slane %v372, 3
    %v416 = vsel %vm392, %v413, %v415
    %v417 = vrot.slane %v373, 3
    %v418 = vsel %vm392, %v415, %v417
    %v419 = vrot.slane %v374, 3
    %v420 = vsel %vm392, %v417, %v419
    %v421 = vrot.slane %v375, 3
    %v422 = vsel %vm392, %v419, %v421
    %v437 = vadd.f32 %v340, %v395
    %v438 = vadd.f32 %v341, %v397
    %v439 = vadd.f32 %v342, %v399
    %v440 = vadd.f32 %v343, %v401
    %v441 = vadd.f32 %v344, %v403
    %v442 = vadd.f32 %v345, %v405
    %v443 = vadd.f32 %v346, %v407
    %v444 = vadd.f32 %v347, %v410
    %v445 = vadd.f32 %v348, %v412
    %v446 = vadd.f32 %v349, %v414
    %v447 = vadd.f32 %v350, %v416
    %v448 = vadd.f32 %v351, %v418
    %v449 = vadd.f32 %v352, %v420
    %v450 = vadd.f32 %v353, %v422
    %v452 = vlaneseq
    %v453 = vshrl.u32 %v452, 7
    %v454 = vsub.s32 0, %v453
    %v455 = vrot.slane %v41, %v454
    %v457 = vmul.f32 %v49, %v455
    %v458 = vmul.f32 %v54, %v455
    %v459 = vmul.f32 %v59, %v455
    %v460 = vmul.f32 %v64, %v455
    %v461 = vmul.f32 %v69, %v455
    %v462 = vmul.f32 %v74, %v455
    %v463 = vmul.f32 %v79, %v455
    %v464 = vmul.f32 %v153, %v455
    %v465 = vmul.f32 %v84, %v455
    %v466 = vmul.f32 %v89, %v455
    %v467 = vmul.f32 %v94, %v455
    %v468 = vmul.f32 %v99, %v455
    %v469 = vmul.f32 %v104, %v455
    %v470 = vmul.f32 %v109, %v455
    %v471 = vmul.f32 %v114, %v455
    %v472 = vmul.f32 %v158, %v455
    %vm489 = vcmask 1043456
    %v490 = vrot.slane %v457, 4
    %v491 = vrot.slane %v458, 4
    %v492 = vsel %vm489, %v490, %v491
    %v493 = vrot.slane %v459, 4
    %v494 = vsel %vm489, %v491, %v493
    %v495 = vrot.slane %v460, 4
    %v496 = vsel %vm489, %v493, %v495
    %v497 = vrot.slane %v461, 4
    %v498 = vsel %vm489, %v495, %v497
    %v499 = vrot.slane %v462, 4
    %v500 = vsel %vm489, %v497, %v499
    %v501 = vrot.slane %v463, 4
    %v502 = vsel %vm489, %v499, %v501
    %v503 = vrot.slane %v464, 4
    %v504 = vsel %vm489, %v501, %v503
    %v505 = vrot.slane %v465, 4
    %v506 = vrot.slane %v466, 4
    %v507 = vsel %vm489, %v505, %v506
    %v508 = vrot.slane %v467, 4
    %v509 = vsel %vm489, %v506, %v508
    %v510 = vrot.slane %v468, 4
    %v511 = vsel %vm489, %v508, %v510
    %v512 = vrot.slane %v469, 4
    %v513 = vsel %vm489, %v510, %v512
    %v514 = vrot.slane %v470, 4
    %v515 = vsel %vm489, %v512, %v514
    %v516 = vrot.slane %v471, 4
    %v517 = vsel %vm489, %v514, %v516
    %v518 = vrot.slane %v472, 4
    %v519 = vsel %vm489, %v516, %v518
    %v534 = vadd.f32 %v437, %v492
    %v535 = vadd.f32 %v438, %v494
    %v536 = vadd.f32 %v439, %v496
    %v537 = vadd.f32 %v440, %v498
    %v538 = vadd.f32 %v441, %v500
    %v539 = vadd.f32 %v442, %v502
    %v540 = vadd.f32 %v443, %v504
    %v541 = vadd.f32 %v444, %v507
    %v542 = vadd.f32 %v445, %v509
    %v543 = vadd.f32 %v446, %v511
    %v544 = vadd.f32 %v447, %v513
    %v545 = vadd.f32 %v448, %v515
    %v546 = vadd.f32 %v449, %v517
    %v547 = vadd.f32 %v450, %v519
    %v549 = vlaneseq
    %v550 = vshrl.u32 %v549, 7
    %v551 = vsub.s32 0, %v550
    %v552 = vrot.slane %v42, %v551
    %v554 = vmul.f32 %v49, %v552
    %v555 = vmul.f32 %v54, %v552
    %v556 = vmul.f32 %v59, %v552
    %v557 = vmul.f32 %v64, %v552
    %v558 = vmul.f32 %v69, %v552
    %v559 = vmul.f32 %v74, %v552
    %v560 = vmul.f32 %v79, %v552
    %v561 = vmul.f32 %v153, %v552
    %v562 = vmul.f32 %v84, %v552
    %v563 = vmul.f32 %v89, %v552
    %v564 = vmul.f32 %v94, %v552
    %v565 = vmul.f32 %v99, %v552
    %v566 = vmul.f32 %v104, %v552
    %v567 = vmul.f32 %v109, %v552
    %v568 = vmul.f32 %v114, %v552
    %v569 = vmul.f32 %v158, %v552
    %vm586 = vcmask 1042432
    %v587 = vrot.slane %v554, 5
    %v588 = vrot.slane %v555, 5
    %v589 = vsel %vm586, %v587, %v588
    %v590 = vrot.slane %v556, 5
    %v591 = vsel %vm586, %v588, %v590
    %v592 = vrot.slane %v557, 5
    %v593 = vsel %vm586, %v590, %v592
    %v594 = vrot.slane %v558, 5
    %v595 = vsel %vm586, %v592, %v594
    %v596 = vrot.slane %v559, 5
    %v597 = vsel %vm586, %v594, %v596
    %v598 = vrot.slane %v560, 5
    %v599 = vsel %vm586, %v596, %v598
    %v600 = vrot.slane %v561, 5
    %v601 = vsel %vm586, %v598, %v600
    %v602 = vrot.slane %v562, 5
    %v603 = vrot.slane %v563, 5
    %v604 = vsel %vm586, %v602, %v603
    %v605 = vrot.slane %v564, 5
    %v606 = vsel %vm586, %v603, %v605
    %v607 = vrot.slane %v565, 5
    %v608 = vsel %vm586, %v605, %v607
    %v609 = vrot.slane %v566, 5
    %v610 = vsel %vm586, %v607, %v609
    %v611 = vrot.slane %v567, 5
    %v612 = vsel %vm586, %v609, %v611
    %v613 = vrot.slane %v568, 5
    %v614 = vsel %vm586, %v611, %v613
    %v615 = vrot.slane %v569, 5
    %v616 = vsel %vm586, %v613, %v615
    %v631 = vadd.f32 %v534, %v589
    %v632 = vadd.f32 %v535, %v591
    %v633 = vadd.f32 %v536, %v593
    %v634 = vadd.f32 %v537, %v595
    %v635 = vadd.f32 %v538, %v597
    %v636 = vadd.f32 %v539, %v599
    %v637 = vadd.f32 %v540, %v601
    %v638 = vadd.f32 %v541, %v604
    %v639 = vadd.f32 %v542, %v606
    %v640 = vadd.f32 %v543, %v608
    %v641 = vadd.f32 %v544, %v610
    %v642 = vadd.f32 %v545, %v612
    %v643 = vadd.f32 %v546, %v614
    %v644 = vadd.f32 %v547, %v616
    %v646 = vlaneseq
    %v647 = vshrl.u32 %v646, 7
    %v648 = vsub.s32 0, %v647
    %v649 = vrot.slane %v43, %v648
    %v651 = vmul.f32 %v49, %v649
    %v652 = vmul.f32 %v54, %v649
    %v653 = vmul.f32 %v59, %v649
    %v654 = vmul.f32 %v64, %v649
    %v655 = vmul.f32 %v69, %v649
    %v656 = vmul.f32 %v74, %v649
    %v657 = vmul.f32 %v79, %v649
    %v658 = vmul.f32 %v153, %v649
    %v659 = vmul.f32 %v84, %v649
    %v660 = vmul.f32 %v89, %v649
    %v661 = vmul.f32 %v94, %v649
    %v662 = vmul.f32 %v99, %v649
    %v663 = vmul.f32 %v104, %v649
    %v664 = vmul.f32 %v109, %v649
    %v665 = vmul.f32 %v114, %v649
    %v666 = vmul.f32 %v158, %v649
    %vm683 = vcmask 1041408
    %v684 = vrot.slane %v651, 6
    %v685 = vrot.slane %v652, 6
    %v686 = vsel %vm683, %v684, %v685
    %v687 = vrot.slane %v653, 6
    %v688 = vsel %vm683, %v685, %v687
    %v689 = vrot.slane %v654, 6
    %v690 = vsel %vm683, %v687, %v689
    %v691 = vrot.slane %v655, 6
    %v692 = vsel %vm683, %v689, %v691
    %v693 = vrot.slane %v656, 6
    %v694 = vsel %vm683, %v691, %v693
    %v695 = vrot.slane %v657, 6
    %v696 = vsel %vm683, %v693, %v695
    %v697 = vrot.slane %v658, 6
    %v698 = vsel %vm683, %v695, %v697
    %v699 = vrot.slane %v659, 6
    %v700 = vrot.slane %v660, 6
    %v701 = vsel %vm683, %v699, %v700
    %v702 = vrot.slane %v661, 6
    %v703 = vsel %vm683, %v700, %v702
    %v704 = vrot.slane %v662, 6
    %v705 = vsel %vm683, %v702, %v704
    %v706 = vrot.slane %v663, 6
    %v707 = vsel %vm683, %v704, %v706
    %v708 = vrot.slane %v664, 6
    %v709 = vsel %vm683, %v706, %v708
    %v710 = vrot.slane %v665, 6
    %v711 = vsel %vm683, %v708, %v710
    %v712 = vrot.slane %v666, 6
    %v713 = vsel %vm683, %v710, %v712
    %v728 = vadd.f32 %v631, %v686
    %v729 = vadd.f32 %v632, %v688
    %v730 = vadd.f32 %v633, %v690
    %v731 = vadd.f32 %v634, %v692
    %v732 = vadd.f32 %v635, %v694
    %v733 = vadd.f32 %v636, %v696
    %v734 = vadd.f32 %v637, %v698
    %v735 = vadd.f32 %v638, %v701
    %v736 = vadd.f32 %v639, %v703
    %v737 = vadd.f32 %v640, %v705
    %v738 = vadd.f32 %v641, %v707
    %v739 = vadd.f32 %v642, %v709
    %v740 = vadd.f32 %v643, %v711
    %v741 = vadd.f32 %v644, %v713
    %v743 = vlaneseq
    %v744 = vshrl.u32 %v743, 7
    %v745 = vsub.s32 0, %v744
    %v746 = vrot.slane %v44, %v745
    %v748 = vmul.f32 %v49, %v746
    %v749 = vmul.f32 %v54, %v746
    %v750 = vmul.f32 %v59, %v746
    %v751 = vmul.f32 %v64, %v746
    %v752 = vmul.f32 %v69, %v746
    %v753 = vmul.f32 %v74, %v746
    %v754 = vmul.f32 %v79, %v746
    %v755 = vmul.f32 %v153, %v746
    %v756 = vmul.f32 %v84, %v746
    %v757 = vmul.f32 %v89, %v746
    %v758 = vmul.f32 %v94, %v746
    %v759 = vmul.f32 %v99, %v746
    %v760 = vmul.f32 %v104, %v746
    %v761 = vmul.f32 %v109, %v746
    %v762 = vmul.f32 %v114, %v746
    %v763 = vmul.f32 %v158, %v746
    %vm780 = vcmask 1040384
    %v781 = vrot.slane %v748, 7
    %v782 = vrot.slane %v749, 7
    %v783 = vsel %vm780, %v781, %v782
    %v784 = vrot.slane %v750, 7
    %v785 = vsel %vm780, %v782, %v784
    %v786 = vrot.slane %v751, 7
    %v787 = vsel %vm780, %v784, %v786
    %v788 = vrot.slane %v752, 7
    %v789 = vsel %vm780, %v786, %v788
    %v790 = vrot.slane %v753, 7
    %v791 = vsel %vm780, %v788, %v790
    %v792 = vrot.slane %v754, 7
    %v793 = vsel %vm780, %v790, %v792
    %v794 = vrot.slane %v755, 7
    %v795 = vsel %vm780, %v792, %v794
    %v796 = vrot.slane %v756, 7
    %v797 = vrot.slane %v757, 7
    %v798 = vsel %vm780, %v796, %v797
    %v799 = vrot.slane %v758, 7
    %v800 = vsel %vm780, %v797, %v799
    %v801 = vrot.slane %v759, 7
    %v802 = vsel %vm780, %v799, %v801
    %v803 = vrot.slane %v760, 7
    %v804 = vsel %vm780, %v801, %v803
    %v805 = vrot.slane %v761, 7
    %v806 = vsel %vm780, %v803, %v805
    %v807 = vrot.slane %v762, 7
    %v808 = vsel %vm780, %v805, %v807
    %v809 = vrot.slane %v763, 7
    %v810 = vsel %vm780, %v807, %v809
    %v825 = vadd.f32 %v728, %v783
    %v826 = vadd.f32 %v729, %v785
    %v827 = vadd.f32 %v730, %v787
    %v828 = vadd.f32 %v731, %v789
    %v829 = vadd.f32 %v732, %v791
    %v830 = vadd.f32 %v733, %v793
    %v831 = vadd.f32 %v734, %v795
    %v832 = vadd.f32 %v735, %v798
    %v833 = vadd.f32 %v736, %v800
    %v834 = vadd.f32 %v737, %v802
    %v835 = vadd.f32 %v738, %v804
    %v836 = vadd.f32 %v739, %v806
    %v837 = vadd.f32 %v740, %v808
    %v838 = vadd.f32 %v741, %v810
    %v840 = vlaneseq
    %v841 = vshrl.u32 %v840, 7
    %v842 = vsub.s32 0, %v841
    %v843 = vrot.slane %v45, %v842
    %v845 = vmul.f32 %v54, %v843
    %v846 = vmul.f32 %v59, %v843
    %v847 = vmul.f32 %v64, %v843
    %v848 = vmul.f32 %v69, %v843
    %v849 = vmul.f32 %v74, %v843
    %v850 = vmul.f32 %v79, %v843
    %v851 = vmul.f32 %v153, %v843
    %v852 = vmul.f32 %v89, %v843
    %v853 = vmul.f32 %v94, %v843
    %v854 = vmul.f32 %v99, %v843
    %v855 = vmul.f32 %v104, %v843
    %v856 = vmul.f32 %v109, %v843
    %v857 = vmul.f32 %v114, %v843
    %v858 = vmul.f32 %v158, %v843
    %v859 = vadd.f32 %v825, %v845
    %v860 = vadd.f32 %v826, %v846
    %v861 = vadd.f32 %v827, %v847
    %v862 = vadd.f32 %v828, %v848
    %v863 = vadd.f32 %v829, %v849
    %v864 = vadd.f32 %v830, %v850
    %v865 = vadd.f32 %v831, %v851
    %v866 = vadd.f32 %v832, %v852
    %v867 = vadd.f32 %v833, %v853
    %v868 = vadd.f32 %v834, %v854
    %v869 = vadd.f32 %v835, %v855
    %v870 = vadd.f32 %v836, %v856
    %v871 = vadd.f32 %v837, %v857
    %v872 = vadd.f32 %v838, %v858
    %v873 = vld [vmem:[%s2] sm:$0x1]
    %v875 = vlaneseq
    %v876 = vshrl.u32 %v875, 7
    %v877 = vsub.s32 0, %v876
    %v878 = vrot.slane %v873, %v877
    %v880 = vadd.f32 %v859, %v878
    %v881 = vadd.f32 %v860, %v878
    %v882 = vadd.f32 %v861, %v878
    %v883 = vadd.f32 %v862, %v878
    %v884 = vadd.f32 %v863, %v878
    %v885 = vadd.f32 %v864, %v878
    %v886 = vadd.f32 %v865, %v878
    %v887 = vadd.f32 %v866, %v878
    %v888 = vadd.f32 %v867, %v878
    %v889 = vadd.f32 %v868, %v878
    %v890 = vadd.f32 %v869, %v878
    %v891 = vadd.f32 %v870, %v878
    %v892 = vadd.f32 %v871, %v878
    %v893 = vadd.f32 %v872, %v878
    %v894 = vadd.f32 %v880, %v881
    %v895 = vadd.f32 %v894, %v882
    %v896 = vadd.f32 %v895, %v883
    %v897 = vadd.f32 %v896, %v884
    %v898 = vadd.f32 %v897, %v885
    %v899 = vadd.f32 %v898, %v886
    %v900 = vadd.f32 %v899, %v887
    %v901 = vadd.f32 %v900, %v888
    %v902 = vadd.f32 %v901, %v889
    %v903 = vadd.f32 %v902, %v890
    %v904 = vadd.f32 %v903, %v891
    %v905 = vadd.f32 %v904, %v892
    %v906 = vadd.f32 %v905, %v893
    %v907 = vrot.slane %v906, 4
    %v908 = vadd.f32 %v906, %v907
    %v909 = vrot.slane %v908, 2
    %v910 = vadd.f32 %v908, %v909
    %v911 = vrot.slane %v910, 1
    %v912 = vadd.f32 %v910, %v911
    %v913 = vmul.f32 %v880, %v880
    %v914 = vmul.f32 %v881, %v881
    %v915 = vmul.f32 %v882, %v882
    %v916 = vmul.f32 %v883, %v883
    %v917 = vmul.f32 %v884, %v884
    %v918 = vmul.f32 %v885, %v885
    %v919 = vmul.f32 %v886, %v886
    %v920 = vmul.f32 %v887, %v887
    %v921 = vmul.f32 %v888, %v888
    %v922 = vmul.f32 %v889, %v889
    %v923 = vmul.f32 %v890, %v890
    %v924 = vmul.f32 %v891, %v891
    %v925 = vmul.f32 %v892, %v892
    %v926 = vmul.f32 %v893, %v893
    %v927 = vadd.f32 %v913, %v914
    %v928 = vadd.f32 %v927, %v915
    %v929 = vadd.f32 %v928, %v916
    %v930 = vadd.f32 %v929, %v917
    %v931 = vadd.f32 %v930, %v918
    %v932 = vadd.f32 %v931, %v919
    %v933 = vadd.f32 %v932, %v920
    %v934 = vadd.f32 %v933, %v921
    %v935 = vadd.f32 %v934, %v922
    %v936 = vadd.f32 %v935, %v923
    %v937 = vadd.f32 %v936, %v924
    %v938 = vadd.f32 %v937, %v925
    %v939 = vadd.f32 %v938, %v926
    %v940 = vrot.slane %v939, 4
    %v941 = vadd.f32 %v939, %v940
    %v942 = vrot.slane %v941, 2
    %v943 = vadd.f32 %v941, %v942
    %v944 = vrot.slane %v943, 1
    %v945 = vadd.f32 %v943, %v944
    %v946 = vrcp.pop 112.0
    %v947 = vmul.f32 %v912, %v946
    %v948 = vmul.f32 %v945, %v946
    %v949 = vmul.f32 %v947, %v947
    %v950 = vsub.f32 %v948, %v949
    %v951 = vmax.f32 %v950, 0.0
    %v952 = vld [vmem:[%s3] sm:$0x1]
    %v953 = vadd.f32 %v951, 1e-05
    %v954 = vrsqrt.pop %v953
    %v955 = vmul.f32 %v952, %v954
    %v956 = vld [vmem:[%s4] sm:$0x1]
    %v957 = vmul.f32 %v947, %v955
    %v958 = vsub.f32 %v956, %v957
    %v973 = vcombine.high %v880, %v880
    %v975 = vunpack.c.l.s4 1983009808
    %v976 = vunpack.c.0.s8 %v975
    %v977 = vlaneseq
    %v978 = vshrl.u32 %v977, 7
    %v979 = vsub.s32 %v976, %v978
    %v980 = vrot.slane %v880, %v979
    %v982 = vunpack.c.l.s4 1983009808
    %v983 = vunpack.c.0.s8 %v982
    %v984 = vlaneseq
    %v985 = vshrl.u32 %v984, 7
    %v986 = vsub.s32 %v983, %v985
    %v987 = vrot.slane %v973, %v986
    %v988 = vcombine.high %v980, %v980
    %v989 = vcombine.high %v987, %v987
    %v990 = vcombine.high %v881, %v881
    %v992 = vunpack.c.l.s4 1983009808
    %v993 = vunpack.c.0.s8 %v992
    %v994 = vlaneseq
    %v995 = vshrl.u32 %v994, 7
    %v996 = vsub.s32 %v993, %v995
    %v997 = vrot.slane %v881, %v996
    %v999 = vunpack.c.l.s4 1983009808
    %v1000 = vunpack.c.0.s8 %v999
    %v1001 = vlaneseq
    %v1002 = vshrl.u32 %v1001, 7
    %v1003 = vsub.s32 %v1000, %v1002
    %v1004 = vrot.slane %v990, %v1003
    %v1005 = vcombine.high %v997, %v997
    %v1006 = vcombine.high %v1004, %v1004
    %v1007 = vcombine.high %v882, %v882
    %v1009 = vunpack.c.l.s4 1983009808
    %v1010 = vunpack.c.0.s8 %v1009
    %v1011 = vlaneseq
    %v1012 = vshrl.u32 %v1011, 7
    %v1013 = vsub.s32 %v1010, %v1012
    %v1014 = vrot.slane %v882, %v1013
    %v1016 = vunpack.c.l.s4 1983009808
    %v1017 = vunpack.c.0.s8 %v1016
    %v1018 = vlaneseq
    %v1019 = vshrl.u32 %v1018, 7
    %v1020 = vsub.s32 %v1017, %v1019
    %v1021 = vrot.slane %v1007, %v1020
    %v1022 = vcombine.high %v1014, %v1014
    %v1023 = vcombine.high %v1021, %v1021
    %v1024 = vcombine.high %v883, %v883
    %v1026 = vunpack.c.l.s4 1983009808
    %v1027 = vunpack.c.0.s8 %v1026
    %v1028 = vlaneseq
    %v1029 = vshrl.u32 %v1028, 7
    %v1030 = vsub.s32 %v1027, %v1029
    %v1031 = vrot.slane %v883, %v1030
    %v1033 = vunpack.c.l.s4 1983009808
    %v1034 = vunpack.c.0.s8 %v1033
    %v1035 = vlaneseq
    %v1036 = vshrl.u32 %v1035, 7
    %v1037 = vsub.s32 %v1034, %v1036
    %v1038 = vrot.slane %v1024, %v1037
    %v1039 = vcombine.high %v1031, %v1031
    %v1040 = vcombine.high %v1038, %v1038
    %v1041 = vcombine.high %v884, %v884
    %v1043 = vunpack.c.l.s4 1983009808
    %v1044 = vunpack.c.0.s8 %v1043
    %v1045 = vlaneseq
    %v1046 = vshrl.u32 %v1045, 7
    %v1047 = vsub.s32 %v1044, %v1046
    %v1048 = vrot.slane %v884, %v1047
    %v1050 = vunpack.c.l.s4 1983009808
    %v1051 = vunpack.c.0.s8 %v1050
    %v1052 = vlaneseq
    %v1053 = vshrl.u32 %v1052, 7
    %v1054 = vsub.s32 %v1051, %v1053
    %v1055 = vrot.slane %v1041, %v1054
    %v1056 = vcombine.high %v1048, %v1048
    %v1057 = vcombine.high %v1055, %v1055
    %v1058 = vcombine.high %v885, %v885
    %v1060 = vunpack.c.l.s4 1983009808
    %v1061 = vunpack.c.0.s8 %v1060
    %v1062 = vlaneseq
    %v1063 = vshrl.u32 %v1062, 7
    %v1064 = vsub.s32 %v1061, %v1063
    %v1065 = vrot.slane %v885, %v1064
    %v1067 = vunpack.c.l.s4 1983009808
    %v1068 = vunpack.c.0.s8 %v1067
    %v1069 = vlaneseq
    %v1070 = vshrl.u32 %v1069, 7
    %v1071 = vsub.s32 %v1068, %v1070
    %v1072 = vrot.slane %v1058, %v1071
    %v1073 = vcombine.high %v1065, %v1065
    %v1074 = vcombine.high %v1072, %v1072
    %v1075 = vcombine.high %v886, %v886
    %v1077 = vunpack.c.l.s4 1983009808
    %v1078 = vunpack.c.0.s8 %v1077
    %v1079 = vlaneseq
    %v1080 = vshrl.u32 %v1079, 7
    %v1081 = vsub.s32 %v1078, %v1080
    %v1082 = vrot.slane %v886, %v1081
    %v1084 = vunpack.c.l.s4 1983009808
    %v1085 = vunpack.c.0.s8 %v1084
    %v1086 = vlaneseq
    %v1087 = vshrl.u32 %v1086, 7
    %v1088 = vsub.s32 %v1085, %v1087
    %v1089 = vrot.slane %v1075, %v1088
    %v1090 = vcombine.high %v1082, %v1082
    %v1091 = vcombine.high %v1089, %v1089
    %v1092 = vcombine.high %v887, %v887
    %v1094 = vunpack.c.l.s4 1983009808
    %v1095 = vunpack.c.0.s8 %v1094
    %v1096 = vlaneseq
    %v1097 = vshrl.u32 %v1096, 7
    %v1098 = vsub.s32 %v1095, %v1097
    %v1099 = vrot.slane %v887, %v1098
    %v1101 = vunpack.c.l.s4 1983009808
    %v1102 = vunpack.c.0.s8 %v1101
    %v1103 = vlaneseq
    %v1104 = vshrl.u32 %v1103, 7
    %v1105 = vsub.s32 %v1102, %v1104
    %v1106 = vrot.slane %v1092, %v1105
    %v1107 = vcombine.high %v1099, %v1099
    %v1108 = vcombine.high %v1106, %v1106
    %v1109 = vcombine.high %v888, %v888
    %v1111 = vunpack.c.l.s4 1983009808
    %v1112 = vunpack.c.0.s8 %v1111
    %v1113 = vlaneseq
    %v1114 = vshrl.u32 %v1113, 7
    %v1115 = vsub.s32 %v1112, %v1114
    %v1116 = vrot.slane %v888, %v1115
    %v1118 = vunpack.c.l.s4 1983009808
    %v1119 = vunpack.c.0.s8 %v1118
    %v1120 = vlaneseq
    %v1121 = vshrl.u32 %v1120, 7
    %v1122 = vsub.s32 %v1119, %v1121
    %v1123 = vrot.slane %v1109, %v1122
    %v1124 = vcombine.high %v1116, %v1116
    %v1125 = vcombine.high %v1123, %v1123
    %v1126 = vcombine.high %v889, %v889
    %v1128 = vunpack.c.l.s4 1983009808
    %v1129 = vunpack.c.0.s8 %v1128
    %v1130 = vlaneseq
    %v1131 = vshrl.u32 %v1130, 7
    %v1132 = vsub.s32 %v1129, %v1131
    %v1133 = vrot.slane %v889, %v1132
    %v1135 = vunpack.c.l.s4 1983009808
    %v1136 = vunpack.c.0.s8 %v1135
    %v1137 = vlaneseq
    %v1138 = vshrl.u32 %v1137, 7
    %v1139 = vsub.s32 %v1136, %v1138
    %v1140 = vrot.slane %v1126, %v1139
    %v1141 = vcombine.high %v1133, %v1133
    %v1142 = vcombine.high %v1140, %v1140
    %v1143 = vcombine.high %v890, %v890
    %v1145 = vunpack.c.l.s4 1983009808
    %v1146 = vunpack.c.0.s8 %v1145
    %v1147 = vlaneseq
    %v1148 = vshrl.u32 %v1147, 7
    %v1149 = vsub.s32 %v1146, %v1148
    %v1150 = vrot.slane %v890, %v1149
    %v1152 = vunpack.c.l.s4 1983009808
    %v1153 = vunpack.c.0.s8 %v1152
    %v1154 = vlaneseq
    %v1155 = vshrl.u32 %v1154, 7
    %v1156 = vsub.s32 %v1153, %v1155
    %v1157 = vrot.slane %v1143, %v1156
    %v1158 = vcombine.high %v1150, %v1150
    %v1159 = vcombine.high %v1157, %v1157
    %v1160 = vcombine.high %v891, %v891
    %v1162 = vunpack.c.l.s4 1983009808
    %v1163 = vunpack.c.0.s8 %v1162
    %v1164 = vlaneseq
    %v1165 = vshrl.u32 %v1164, 7
    %v1166 = vsub.s32 %v1163, %v1165
    %v1167 = vrot.slane %v891, %v1166
    %v1169 = vunpack.c.l.s4 1983009808
    %v1170 = vunpack.c.0.s8 %v1169
    %v1171 = vlaneseq
    %v1172 = vshrl.u32 %v1171, 7
    %v1173 = vsub.s32 %v1170, %v1172
    %v1174 = vrot.slane %v1160, %v1173
    %v1175 = vcombine.high %v1167, %v1167
    %v1176 = vcombine.high %v1174, %v1174
    %v1177 = vcombine.high %v892, %v892
    %v1179 = vunpack.c.l.s4 1983009808
    %v1180 = vunpack.c.0.s8 %v1179
    %v1181 = vlaneseq
    %v1182 = vshrl.u32 %v1181, 7
    %v1183 = vsub.s32 %v1180, %v1182
    %v1184 = vrot.slane %v892, %v1183
    %v1186 = vunpack.c.l.s4 1983009808
    %v1187 = vunpack.c.0.s8 %v1186
    %v1188 = vlaneseq
    %v1189 = vshrl.u32 %v1188, 7
    %v1190 = vsub.s32 %v1187, %v1189
    %v1191 = vrot.slane %v1177, %v1190
    %v1192 = vcombine.high %v1184, %v1184
    %v1193 = vcombine.high %v1191, %v1191
    %v1194 = vcombine.high %v893, %v893
    %v1196 = vunpack.c.l.s4 1983009808
    %v1197 = vunpack.c.0.s8 %v1196
    %v1198 = vlaneseq
    %v1199 = vshrl.u32 %v1198, 7
    %v1200 = vsub.s32 %v1197, %v1199
    %v1201 = vrot.slane %v893, %v1200
    %v1203 = vunpack.c.l.s4 1983009808
    %v1204 = vunpack.c.0.s8 %v1203
    %v1205 = vlaneseq
    %v1206 = vshrl.u32 %v1205, 7
    %v1207 = vsub.s32 %v1204, %v1206
    %v1208 = vrot.slane %v1194, %v1207
    %v1209 = vcombine.high %v1201, %v1201
    %v1210 = vcombine.high %v1208, %v1208
    %v1267 = vsel %vm683, %v980, -inf
    %v1268 = vrot.slane %v1267, 4
    %v1269 = vmax.f32 %v1267, %v1268
    %v1270 = vrot.slane %v1269, 2
    %v1271 = vmax.f32 %v1269, %v1270
    %v1272 = vrot.slane %v1271, 1
    %v1273 = vmax.f32 %v1271, %v1272
    %v1274 = vsel %vm683, %v988, -inf
    %v1275 = vrot.slane %v1274, 4
    %v1276 = vmax.f32 %v1274, %v1275
    %v1277 = vrot.slane %v1276, 2
    %v1278 = vmax.f32 %v1276, %v1277
    %v1279 = vrot.slane %v1278, 1
    %v1280 = vmax.f32 %v1278, %v1279
    %v1281 = vsel %vm683, %v987, -inf
    %v1282 = vrot.slane %v1281, 4
    %v1283 = vmax.f32 %v1281, %v1282
    %v1284 = vrot.slane %v1283, 2
    %v1285 = vmax.f32 %v1283, %v1284
    %v1286 = vrot.slane %v1285, 1
    %v1287 = vmax.f32 %v1285, %v1286
    %v1288 = vsel %vm683, %v989, -inf
    %v1289 = vrot.slane %v1288, 4
    %v1290 = vmax.f32 %v1288, %v1289
    %v1291 = vrot.slane %v1290, 2
    %v1292 = vmax.f32 %v1290, %v1291
    %v1293 = vrot.slane %v1292, 1
    %v1294 = vmax.f32 %v1292, %v1293
    %v1295 = vsel %vm683, %v997, -inf
    %v1296 = vrot.slane %v1295, 4
    %v1297 = vmax.f32 %v1295, %v1296
    %v1298 = vrot.slane %v1297, 2
    %v1299 = vmax.f32 %v1297, %v1298
    %v1300 = vrot.slane %v1299, 1
    %v1301 = vmax.f32 %v1299, %v1300
    %v1302 = vsel %vm683, %v1005, -inf
    %v1303 = vrot.slane %v1302, 4
    %v1304 = vmax.f32 %v1302, %v1303
    %v1305 = vrot.slane %v1304, 2
    %v1306 = vmax.f32 %v1304, %v1305
    %v1307 = vrot.slane %v1306, 1
    %v1308 = vmax.f32 %v1306, %v1307
    %v1309 = vsel %vm683, %v1004, -inf
    %v1310 = vrot.slane %v1309, 4
    %v1311 = vmax.f32 %v1309, %v1310
    %v1312 = vrot.slane %v1311, 2
    %v1313 = vmax.f32 %v1311, %v1312
    %v1314 = vrot.slane %v1313, 1
    %v1315 = vmax.f32 %v1313, %v1314
    %v1316 = vsel %vm683, %v1006, -inf
    %v1317 = vrot.slane %v1316, 4
    %v1318 = vmax.f32 %v1316, %v1317
    %v1319 = vrot.slane %v1318, 2
    %v1320 = vmax.f32 %v1318, %v1319
    %v1321 = vrot.slane %v1320, 1
    %v1322 = vmax.f32 %v1320, %v1321
    %v1323 = vsel %vm683, %v1014, -inf
    %v1324 = vrot.slane %v1323, 4
    %v1325 = vmax.f32 %v1323, %v1324
    %v1326 = vrot.slane %v1325, 2
    %v1327 = vmax.f32 %v1325, %v1326
    %v1328 = vrot.slane %v1327, 1
    %v1329 = vmax.f32 %v1327, %v1328
    %v1330 = vsel %vm683, %v1022, -inf
    %v1331 = vrot.slane %v1330, 4
    %v1332 = vmax.f32 %v1330, %v1331
    %v1333 = vrot.slane %v1332, 2
    %v1334 = vmax.f32 %v1332, %v1333
    %v1335 = vrot.slane %v1334, 1
    %v1336 = vmax.f32 %v1334, %v1335
    %v1337 = vsel %vm683, %v1021, -inf
    %v1338 = vrot.slane %v1337, 4
    %v1339 = vmax.f32 %v1337, %v1338
    %v1340 = vrot.slane %v1339, 2
    %v1341 = vmax.f32 %v1339, %v1340
    %v1342 = vrot.slane %v1341, 1
    %v1343 = vmax.f32 %v1341, %v1342
    %v1344 = vsel %vm683, %v1023, -inf
    %v1345 = vrot.slane %v1344, 4
    %v1346 = vmax.f32 %v1344, %v1345
    %v1347 = vrot.slane %v1346, 2
    %v1348 = vmax.f32 %v1346, %v1347
    %v1349 = vrot.slane %v1348, 1
    %v1350 = vmax.f32 %v1348, %v1349
    %v1351 = vsel %vm683, %v1031, -inf
    %v1352 = vrot.slane %v1351, 4
    %v1353 = vmax.f32 %v1351, %v1352
    %v1354 = vrot.slane %v1353, 2
    %v1355 = vmax.f32 %v1353, %v1354
    %v1356 = vrot.slane %v1355, 1
    %v1357 = vmax.f32 %v1355, %v1356
    %v1358 = vsel %vm683, %v1039, -inf
    %v1359 = vrot.slane %v1358, 4
    %v1360 = vmax.f32 %v1358, %v1359
    %v1361 = vrot.slane %v1360, 2
    %v1362 = vmax.f32 %v1360, %v1361
    %v1363 = vrot.slane %v1362, 1
    %v1364 = vmax.f32 %v1362, %v1363
    %v1365 = vsel %vm683, %v1038, -inf
    %v1366 = vrot.slane %v1365, 4
    %v1367 = vmax.f32 %v1365, %v1366
    %v1368 = vrot.slane %v1367, 2
    %v1369 = vmax.f32 %v1367, %v1368
    %v1370 = vrot.slane %v1369, 1
    %v1371 = vmax.f32 %v1369, %v1370
    %v1372 = vsel %vm683, %v1040, -inf
    %v1373 = vrot.slane %v1372, 4
    %v1374 = vmax.f32 %v1372, %v1373
    %v1375 = vrot.slane %v1374, 2
    %v1376 = vmax.f32 %v1374, %v1375
    %v1377 = vrot.slane %v1376, 1
    %v1378 = vmax.f32 %v1376, %v1377
    %v1379 = vsel %vm683, %v1048, -inf
    %v1380 = vrot.slane %v1379, 4
    %v1381 = vmax.f32 %v1379, %v1380
    %v1382 = vrot.slane %v1381, 2
    %v1383 = vmax.f32 %v1381, %v1382
    %v1384 = vrot.slane %v1383, 1
    %v1385 = vmax.f32 %v1383, %v1384
    %v1386 = vsel %vm683, %v1056, -inf
    %v1387 = vrot.slane %v1386, 4
    %v1388 = vmax.f32 %v1386, %v1387
    %v1389 = vrot.slane %v1388, 2
    %v1390 = vmax.f32 %v1388, %v1389
    %v1391 = vrot.slane %v1390, 1
    %v1392 = vmax.f32 %v1390, %v1391
    %v1393 = vsel %vm683, %v1055, -inf
    %v1394 = vrot.slane %v1393, 4
    %v1395 = vmax.f32 %v1393, %v1394
    %v1396 = vrot.slane %v1395, 2
    %v1397 = vmax.f32 %v1395, %v1396
    %v1398 = vrot.slane %v1397, 1
    %v1399 = vmax.f32 %v1397, %v1398
    %v1400 = vsel %vm683, %v1057, -inf
    %v1401 = vrot.slane %v1400, 4
    %v1402 = vmax.f32 %v1400, %v1401
    %v1403 = vrot.slane %v1402, 2
    %v1404 = vmax.f32 %v1402, %v1403
    %v1405 = vrot.slane %v1404, 1
    %v1406 = vmax.f32 %v1404, %v1405
    %v1407 = vsel %vm683, %v1065, -inf
    %v1408 = vrot.slane %v1407, 4
    %v1409 = vmax.f32 %v1407, %v1408
    %v1410 = vrot.slane %v1409, 2
    %v1411 = vmax.f32 %v1409, %v1410
    %v1412 = vrot.slane %v1411, 1
    %v1413 = vmax.f32 %v1411, %v1412
    %v1414 = vsel %vm683, %v1073, -inf
    %v1415 = vrot.slane %v1414, 4
    %v1416 = vmax.f32 %v1414, %v1415
    %v1417 = vrot.slane %v1416, 2
    %v1418 = vmax.f32 %v1416, %v1417
    %v1419 = vrot.slane %v1418, 1
    %v1420 = vmax.f32 %v1418, %v1419
    %v1421 = vsel %vm683, %v1072, -inf
    %v1422 = vrot.slane %v1421, 4
    %v1423 = vmax.f32 %v1421, %v1422
    %v1424 = vrot.slane %v1423, 2
    %v1425 = vmax.f32 %v1423, %v1424
    %v1426 = vrot.slane %v1425, 1
    %v1427 = vmax.f32 %v1425, %v1426
    %v1428 = vsel %vm683, %v1074, -inf
    %v1429 = vrot.slane %v1428, 4
    %v1430 = vmax.f32 %v1428, %v1429
    %v1431 = vrot.slane %v1430, 2
    %v1432 = vmax.f32 %v1430, %v1431
    %v1433 = vrot.slane %v1432, 1
    %v1434 = vmax.f32 %v1432, %v1433
    %v1435 = vsel %vm683, %v1082, -inf
    %v1436 = vrot.slane %v1435, 4
    %v1437 = vmax.f32 %v1435, %v1436
    %v1438 = vrot.slane %v1437, 2
    %v1439 = vmax.f32 %v1437, %v1438
    %v1440 = vrot.slane %v1439, 1
    %v1441 = vmax.f32 %v1439, %v1440
    %v1442 = vsel %vm683, %v1090, -inf
    %v1443 = vrot.slane %v1442, 4
    %v1444 = vmax.f32 %v1442, %v1443
    %v1445 = vrot.slane %v1444, 2
    %v1446 = vmax.f32 %v1444, %v1445
    %v1447 = vrot.slane %v1446, 1
    %v1448 = vmax.f32 %v1446, %v1447
    %v1449 = vsel %vm683, %v1089, -inf
    %v1450 = vrot.slane %v1449, 4
    %v1451 = vmax.f32 %v1449, %v1450
    %v1452 = vrot.slane %v1451, 2
    %v1453 = vmax.f32 %v1451, %v1452
    %v1454 = vrot.slane %v1453, 1
    %v1455 = vmax.f32 %v1453, %v1454
    %v1456 = vsel %vm683, %v1091, -inf
    %v1457 = vrot.slane %v1456, 4
    %v1458 = vmax.f32 %v1456, %v1457
    %v1459 = vrot.slane %v1458, 2
    %v1460 = vmax.f32 %v1458, %v1459
    %v1461 = vrot.slane %v1460, 1
    %v1462 = vmax.f32 %v1460, %v1461
    %v1463 = vsel %vm683, %v1099, -inf
    %v1464 = vrot.slane %v1463, 4
    %v1465 = vmax.f32 %v1463, %v1464
    %v1466 = vrot.slane %v1465, 2
    %v1467 = vmax.f32 %v1465, %v1466
    %v1468 = vrot.slane %v1467, 1
    %v1469 = vmax.f32 %v1467, %v1468
    %v1470 = vsel %vm683, %v1107, -inf
    %v1471 = vrot.slane %v1470, 4
    %v1472 = vmax.f32 %v1470, %v1471
    %v1473 = vrot.slane %v1472, 2
    %v1474 = vmax.f32 %v1472, %v1473
    %v1475 = vrot.slane %v1474, 1
    %v1476 = vmax.f32 %v1474, %v1475
    %v1477 = vsel %vm683, %v1106, -inf
    %v1478 = vrot.slane %v1477, 4
    %v1479 = vmax.f32 %v1477, %v1478
    %v1480 = vrot.slane %v1479, 2
    %v1481 = vmax.f32 %v1479, %v1480
    %v1482 = vrot.slane %v1481, 1
    %v1483 = vmax.f32 %v1481, %v1482
    %v1484 = vsel %vm683, %v1108, -inf
    %v1485 = vrot.slane %v1484, 4
    %v1486 = vmax.f32 %v1484, %v1485
    %v1487 = vrot.slane %v1486, 2
    %v1488 = vmax.f32 %v1486, %v1487
    %v1489 = vrot.slane %v1488, 1
    %v1490 = vmax.f32 %v1488, %v1489
    %v1491 = vsel %vm683, %v1116, -inf
    %v1492 = vrot.slane %v1491, 4
    %v1493 = vmax.f32 %v1491, %v1492
    %v1494 = vrot.slane %v1493, 2
    %v1495 = vmax.f32 %v1493, %v1494
    %v1496 = vrot.slane %v1495, 1
    %v1497 = vmax.f32 %v1495, %v1496
    %v1498 = vsel %vm683, %v1124, -inf
    %v1499 = vrot.slane %v1498, 4
    %v1500 = vmax.f32 %v1498, %v1499
    %v1501 = vrot.slane %v1500, 2
    %v1502 = vmax.f32 %v1500, %v1501
    %v1503 = vrot.slane %v1502, 1
    %v1504 = vmax.f32 %v1502, %v1503
    %v1505 = vsel %vm683, %v1123, -inf
    %v1506 = vrot.slane %v1505, 4
    %v1507 = vmax.f32 %v1505, %v1506
    %v1508 = vrot.slane %v1507, 2
    %v1509 = vmax.f32 %v1507, %v1508
    %v1510 = vrot.slane %v1509, 1
    %v1511 = vmax.f32 %v1509, %v1510
    %v1512 = vsel %vm683, %v1125, -inf
    %v1513 = vrot.slane %v1512, 4
    %v1514 = vmax.f32 %v1512, %v1513
    %v1515 = vrot.slane %v1514, 2
    %v1516 = vmax.f32 %v1514, %v1515
    %v1517 = vrot.slane %v1516, 1
    %v1518 = vmax.f32 %v1516, %v1517
    %v1519 = vsel %vm683, %v1133, -inf
    %v1520 = vrot.slane %v1519, 4
    %v1521 = vmax.f32 %v1519, %v1520
    %v1522 = vrot.slane %v1521, 2
    %v1523 = vmax.f32 %v1521, %v1522
    %v1524 = vrot.slane %v1523, 1
    %v1525 = vmax.f32 %v1523, %v1524
    %v1526 = vsel %vm683, %v1141, -inf
    %v1527 = vrot.slane %v1526, 4
    %v1528 = vmax.f32 %v1526, %v1527
    %v1529 = vrot.slane %v1528, 2
    %v1530 = vmax.f32 %v1528, %v1529
    %v1531 = vrot.slane %v1530, 1
    %v1532 = vmax.f32 %v1530, %v1531
    %v1533 = vsel %vm683, %v1140, -inf
    %v1534 = vrot.slane %v1533, 4
    %v1535 = vmax.f32 %v1533, %v1534
    %v1536 = vrot.slane %v1535, 2
    %v1537 = vmax.f32 %v1535, %v1536
    %v1538 = vrot.slane %v1537, 1
    %v1539 = vmax.f32 %v1537, %v1538
    %v1540 = vsel %vm683, %v1142, -inf
    %v1541 = vrot.slane %v1540, 4
    %v1542 = vmax.f32 %v1540, %v1541
    %v1543 = vrot.slane %v1542, 2
    %v1544 = vmax.f32 %v1542, %v1543
    %v1545 = vrot.slane %v1544, 1
    %v1546 = vmax.f32 %v1544, %v1545
    %v1547 = vsel %vm683, %v1150, -inf
    %v1548 = vrot.slane %v1547, 4
    %v1549 = vmax.f32 %v1547, %v1548
    %v1550 = vrot.slane %v1549, 2
    %v1551 = vmax.f32 %v1549, %v1550
    %v1552 = vrot.slane %v1551, 1
    %v1553 = vmax.f32 %v1551, %v1552
    %v1554 = vsel %vm683, %v1158, -inf
    %v1555 = vrot.slane %v1554, 4
    %v1556 = vmax.f32 %v1554, %v1555
    %v1557 = vrot.slane %v1556, 2
    %v1558 = vmax.f32 %v1556, %v1557
    %v1559 = vrot.slane %v1558, 1
    %v1560 = vmax.f32 %v1558, %v1559
    %v1561 = vsel %vm683, %v1157, -inf
    %v1562 = vrot.slane %v1561, 4
    %v1563 = vmax.f32 %v1561, %v1562
    %v1564 = vrot.slane %v1563, 2
    %v1565 = vmax.f32 %v1563, %v1564
    %v1566 = vrot.slane %v1565, 1
    %v1567 = vmax.f32 %v1565, %v1566
    %v1568 = vsel %vm683, %v1159, -inf
    %v1569 = vrot.slane %v1568, 4
    %v1570 = vmax.f32 %v1568, %v1569
    %v1571 = vrot.slane %v1570, 2
    %v1572 = vmax.f32 %v1570, %v1571
    %v1573 = vrot.slane %v1572, 1
    %v1574 = vmax.f32 %v1572, %v1573
    %v1575 = vsel %vm683, %v1167, -inf
    %v1576 = vrot.slane %v1575, 4
    %v1577 = vmax.f32 %v1575, %v1576
    %v1578 = vrot.slane %v1577, 2
    %v1579 = vmax.f32 %v1577, %v1578
    %v1580 = vrot.slane %v1579, 1
    %v1581 = vmax.f32 %v1579, %v1580
    %v1582 = vsel %vm683, %v1175, -inf
    %v1583 = vrot.slane %v1582, 4
    %v1584 = vmax.f32 %v1582, %v1583
    %v1585 = vrot.slane %v1584, 2
    %v1586 = vmax.f32 %v1584, %v1585
    %v1587 = vrot.slane %v1586, 1
    %v1588 = vmax.f32 %v1586, %v1587
    %v1589 = vsel %vm683, %v1174, -inf
    %v1590 = vrot.slane %v1589, 4
    %v1591 = vmax.f32 %v1589, %v1590
    %v1592 = vrot.slane %v1591, 2
    %v1593 = vmax.f32 %v1591, %v1592
    %v1594 = vrot.slane %v1593, 1
    %v1595 = vmax.f32 %v1593, %v1594
    %v1596 = vsel %vm683, %v1176, -inf
    %v1597 = vrot.slane %v1596, 4
    %v1598 = vmax.f32 %v1596, %v1597
    %v1599 = vrot.slane %v1598, 2
    %v1600 = vmax.f32 %v1598, %v1599
    %v1601 = vrot.slane %v1600, 1
    %v1602 = vmax.f32 %v1600, %v1601
    %v1603 = vsel %vm683, %v1184, -inf
    %v1604 = vrot.slane %v1603, 4
    %v1605 = vmax.f32 %v1603, %v1604
    %v1606 = vrot.slane %v1605, 2
    %v1607 = vmax.f32 %v1605, %v1606
    %v1608 = vrot.slane %v1607, 1
    %v1609 = vmax.f32 %v1607, %v1608
    %v1610 = vsel %vm683, %v1192, -inf
    %v1611 = vrot.slane %v1610, 4
    %v1612 = vmax.f32 %v1610, %v1611
    %v1613 = vrot.slane %v1612, 2
    %v1614 = vmax.f32 %v1612, %v1613
    %v1615 = vrot.slane %v1614, 1
    %v1616 = vmax.f32 %v1614, %v1615
    %v1617 = vsel %vm683, %v1191, -inf
    %v1618 = vrot.slane %v1617, 4
    %v1619 = vmax.f32 %v1617, %v1618
    %v1620 = vrot.slane %v1619, 2
    %v1621 = vmax.f32 %v1619, %v1620
    %v1622 = vrot.slane %v1621, 1
    %v1623 = vmax.f32 %v1621, %v1622
    %v1624 = vsel %vm683, %v1193, -inf
    %v1625 = vrot.slane %v1624, 4
    %v1626 = vmax.f32 %v1624, %v1625
    %v1627 = vrot.slane %v1626, 2
    %v1628 = vmax.f32 %v1626, %v1627
    %v1629 = vrot.slane %v1628, 1
    %v1630 = vmax.f32 %v1628, %v1629
    %v1631 = vsel %vm683, %v1201, -inf
    %v1632 = vrot.slane %v1631, 4
    %v1633 = vmax.f32 %v1631, %v1632
    %v1634 = vrot.slane %v1633, 2
    %v1635 = vmax.f32 %v1633, %v1634
    %v1636 = vrot.slane %v1635, 1
    %v1637 = vmax.f32 %v1635, %v1636
    %v1638 = vsel %vm683, %v1209, -inf
    %v1639 = vrot.slane %v1638, 4
    %v1640 = vmax.f32 %v1638, %v1639
    %v1641 = vrot.slane %v1640, 2
    %v1642 = vmax.f32 %v1640, %v1641
    %v1643 = vrot.slane %v1642, 1
    %v1644 = vmax.f32 %v1642, %v1643
    %v1645 = vsel %vm683, %v1208, -inf
    %v1646 = vrot.slane %v1645, 4
    %v1647 = vmax.f32 %v1645, %v1646
    %v1648 = vrot.slane %v1647, 2
    %v1649 = vmax.f32 %v1647, %v1648
    %v1650 = vrot.slane %v1649, 1
    %v1651 = vmax.f32 %v1649, %v1650
    %v1652 = vsel %vm683, %v1210, -inf
    %v1653 = vrot.slane %v1652, 4
    %v1654 = vmax.f32 %v1652, %v1653
    %v1655 = vrot.slane %v1654, 2
    %v1656 = vmax.f32 %v1654, %v1655
    %v1657 = vrot.slane %v1656, 1
    %v1658 = vmax.f32 %v1656, %v1657
    %v1660 = vlaneseq
    %v1661 = vshrl.u32 %v1660, 7
    %v1662 = vsub.s32 0, %v1661
    %v1663 = vrot.slane %v955, %v1662
    %v1665 = vmul.f32 %v1273, %v1663
    %v1666 = vmul.f32 %v1280, %v1663
    %v1667 = vmul.f32 %v1287, %v1663
    %v1668 = vmul.f32 %v1294, %v1663
    %v1669 = vmul.f32 %v1301, %v1663
    %v1670 = vmul.f32 %v1308, %v1663
    %v1671 = vmul.f32 %v1315, %v1663
    %v1672 = vmul.f32 %v1322, %v1663
    %v1673 = vmul.f32 %v1329, %v1663
    %v1674 = vmul.f32 %v1336, %v1663
    %v1675 = vmul.f32 %v1343, %v1663
    %v1676 = vmul.f32 %v1350, %v1663
    %v1677 = vmul.f32 %v1357, %v1663
    %v1678 = vmul.f32 %v1364, %v1663
    %v1679 = vmul.f32 %v1371, %v1663
    %v1680 = vmul.f32 %v1378, %v1663
    %v1681 = vmul.f32 %v1385, %v1663
    %v1682 = vmul.f32 %v1392, %v1663
    %v1683 = vmul.f32 %v1399, %v1663
    %v1684 = vmul.f32 %v1406, %v1663
    %v1685 = vmul.f32 %v1413, %v1663
    %v1686 = vmul.f32 %v1420, %v1663
    %v1687 = vmul.f32 %v1427, %v1663
    %v1688 = vmul.f32 %v1434, %v1663
    %v1689 = vmul.f32 %v1441, %v1663
    %v1690 = vmul.f32 %v1448, %v1663
    %v1691 = vmul.f32 %v1455, %v1663
    %v1692 = vmul.f32 %v1462, %v1663
    %v1693 = vmul.f32 %v1469, %v1663
    %v1694 = vmul.f32 %v1476, %v1663
    %v1695 = vmul.f32 %v1483, %v1663
    %v1696 = vmul.f32 %v1490, %v1663
    %v1697 = vmul.f32 %v1497, %v1663
    %v1698 = vmul.f32 %v1504, %v1663
    %v1699 = vmul.f32 %v1511, %v1663
    %v1700 = vmul.f32 %v1518, %v1663
    %v1701 = vmul.f32 %v1525, %v1663
    %v1702 = vmul.f32 %v1532, %v1663
    %v1703 = vmul.f32 %v1539, %v1663
    %v1704 = vmul.f32 %v1546, %v1663
    %v1705 = vmul.f32 %v1553, %v1663
    %v1706 = vmul.f32 %v1560, %v1663
    %v1707 = vmul.f32 %v1567, %v1663
    %v1708 = vmul.f32 %v1574, %v1663
    %v1709 = vmul.f32 %v1581, %v1663
    %v1710 = vmul.f32 %v1588, %v1663
    %v1711 = vmul.f32 %v1595, %v1663
    %v1712 = vmul.f32 %v1602, %v1663
    %v1713 = vmul.f32 %v1609, %v1663
    %v1714 = vmul.f32 %v1616, %v1663
    %v1715 = vmul.f32 %v1623, %v1663
    %v1716 = vmul.f32 %v1630, %v1663
    %v1717 = vmul.f32 %v1637, %v1663
    %v1718 = vmul.f32 %v1644, %v1663
    %v1719 = vmul.f32 %v1651, %v1663
    %v1720 = vmul.f32 %v1658, %v1663
    %v1722 = vlaneseq
    %v1723 = vshrl.u32 %v1722, 7
    %v1724 = vsub.s32 0, %v1723
    %v1725 = vrot.slane %v958, %v1724
    %v1727 = vadd.f32 %v1665, %v1725
    %v1728 = vadd.f32 %v1666, %v1725
    %v1729 = vadd.f32 %v1667, %v1725
    %v1730 = vadd.f32 %v1668, %v1725
    %v1731 = vadd.f32 %v1669, %v1725
    %v1732 = vadd.f32 %v1670, %v1725
    %v1733 = vadd.f32 %v1671, %v1725
    %v1734 = vadd.f32 %v1672, %v1725
    %v1735 = vadd.f32 %v1673, %v1725
    %v1736 = vadd.f32 %v1674, %v1725
    %v1737 = vadd.f32 %v1675, %v1725
    %v1738 = vadd.f32 %v1676, %v1725
    %v1739 = vadd.f32 %v1677, %v1725
    %v1740 = vadd.f32 %v1678, %v1725
    %v1741 = vadd.f32 %v1679, %v1725
    %v1742 = vadd.f32 %v1680, %v1725
    %v1743 = vadd.f32 %v1681, %v1725
    %v1744 = vadd.f32 %v1682, %v1725
    %v1745 = vadd.f32 %v1683, %v1725
    %v1746 = vadd.f32 %v1684, %v1725
    %v1747 = vadd.f32 %v1685, %v1725
    %v1748 = vadd.f32 %v1686, %v1725
    %v1749 = vadd.f32 %v1687, %v1725
    %v1750 = vadd.f32 %v1688, %v1725
    %v1751 = vadd.f32 %v1689, %v1725
    %v1752 = vadd.f32 %v1690, %v1725
    %v1753 = vadd.f32 %v1691, %v1725
    %v1754 = vadd.f32 %v1692, %v1725
    %v1755 = vadd.f32 %v1693, %v1725
    %v1756 = vadd.f32 %v1694, %v1725
    %v1757 = vadd.f32 %v1695, %v1725
    %v1758 = vadd.f32 %v1696, %v1725
    %v1759 = vadd.f32 %v1697, %v1725
    %v1760 = vadd.f32 %v1698, %v1725
    %v1761 = vadd.f32 %v1699, %v1725
    %v1762 = vadd.f32 %v1700, %v1725
    %v1763 = vadd.f32 %v1701, %v1725
    %v1764 = vadd.f32 %v1702, %v1725
    %v1765 = vadd.f32 %v1703, %v1725
    %v1766 = vadd.f32 %v1704, %v1725
    %v1767 = vadd.f32 %v1705, %v1725
    %v1768 = vadd.f32 %v1706, %v1725
    %v1769 = vadd.f32 %v1707, %v1725
    %v1770 = vadd.f32 %v1708, %v1725
    %v1771 = vadd.f32 %v1709, %v1725
    %v1772 = vadd.f32 %v1710, %v1725
    %v1773 = vadd.f32 %v1711, %v1725
    %v1774 = vadd.f32 %v1712, %v1725
    %v1775 = vadd.f32 %v1713, %v1725
    %v1776 = vadd.f32 %v1714, %v1725
    %v1777 = vadd.f32 %v1715, %v1725
    %v1778 = vadd.f32 %v1716, %v1725
    %v1779 = vadd.f32 %v1717, %v1725
    %v1780 = vadd.f32 %v1718, %v1725
    %v1781 = vadd.f32 %v1719, %v1725
    %v1782 = vadd.f32 %v1720, %v1725
    %v1783 = vmax.f32 %v1727, 0.0
    %v1784 = vmax.f32 %v1728, 0.0
    %v1785 = vmax.f32 %v1729, 0.0
    %v1786 = vmax.f32 %v1730, 0.0
    %v1787 = vmax.f32 %v1731, 0.0
    %v1788 = vmax.f32 %v1732, 0.0
    %v1789 = vmax.f32 %v1733, 0.0
    %v1790 = vmax.f32 %v1734, 0.0
    %v1791 = vmax.f32 %v1735, 0.0
    %v1792 = vmax.f32 %v1736, 0.0
    %v1793 = vmax.f32 %v1737, 0.0
    %v1794 = vmax.f32 %v1738, 0.0
    %v1795 = vmax.f32 %v1739, 0.0
    %v1796 = vmax.f32 %v1740, 0.0
    %v1797 = vmax.f32 %v1741, 0.0
    %v1798 = vmax.f32 %v1742, 0.0
    %v1799 = vmax.f32 %v1743, 0.0
    %v1800 = vmax.f32 %v1744, 0.0
    %v1801 = vmax.f32 %v1745, 0.0
    %v1802 = vmax.f32 %v1746, 0.0
    %v1803 = vmax.f32 %v1747, 0.0
    %v1804 = vmax.f32 %v1748, 0.0
    %v1805 = vmax.f32 %v1749, 0.0
    %v1806 = vmax.f32 %v1750, 0.0
    %v1807 = vmax.f32 %v1751, 0.0
    %v1808 = vmax.f32 %v1752, 0.0
    %v1809 = vmax.f32 %v1753, 0.0
    %v1810 = vmax.f32 %v1754, 0.0
    %v1811 = vmax.f32 %v1755, 0.0
    %v1812 = vmax.f32 %v1756, 0.0
    %v1813 = vmax.f32 %v1757, 0.0
    %v1814 = vmax.f32 %v1758, 0.0
    %v1815 = vmax.f32 %v1759, 0.0
    %v1816 = vmax.f32 %v1760, 0.0
    %v1817 = vmax.f32 %v1761, 0.0
    %v1818 = vmax.f32 %v1762, 0.0
    %v1819 = vmax.f32 %v1763, 0.0
    %v1820 = vmax.f32 %v1764, 0.0
    %v1821 = vmax.f32 %v1765, 0.0
    %v1822 = vmax.f32 %v1766, 0.0
    %v1823 = vmax.f32 %v1767, 0.0
    %v1824 = vmax.f32 %v1768, 0.0
    %v1825 = vmax.f32 %v1769, 0.0
    %v1826 = vmax.f32 %v1770, 0.0
    %v1827 = vmax.f32 %v1771, 0.0
    %v1828 = vmax.f32 %v1772, 0.0
    %v1829 = vmax.f32 %v1773, 0.0
    %v1830 = vmax.f32 %v1774, 0.0
    %v1831 = vmax.f32 %v1775, 0.0
    %v1832 = vmax.f32 %v1776, 0.0
    %v1833 = vmax.f32 %v1777, 0.0
    %v1834 = vmax.f32 %v1778, 0.0
    %v1835 = vmax.f32 %v1779, 0.0
    %v1836 = vmax.f32 %v1780, 0.0
    %v1837 = vmax.f32 %v1781, 0.0
    %v1838 = vmax.f32 %v1782, 0.0
    %v1895 = vrot.slane %v1784, 7
    %vm1896 = vcmask 1041409
    %v1897 = vsel %vm1896, %v1895, %v1783
    %v1898 = vrot.slane %v1785, 6
    %vm1899 = vcmask 1042434
    %v1900 = vsel %vm1899, %v1898, %v1897
    %v1901 = vrot.slane %v1786, 5
    %vm1902 = vcmask 1043459
    %v1903 = vsel %vm1902, %v1901, %v1900
    %v1904 = vrot.slane %v1787, 4
    %vm1905 = vcmask 1044484
    %v1906 = vsel %vm1905, %v1904, %v1903
    %v1907 = vrot.slane %v1788, 3
    %vm1908 = vcmask 1045509
    %v1909 = vsel %vm1908, %v1907, %v1906
    %v1910 = vrot.slane %v1789, 2
    %vm1911 = vcmask 1046534
    %v1912 = vsel %vm1911, %v1910, %v1909
    %v1913 = vrot.slane %v1790, 1
    %vm1914 = vcmask 1047559
    %v1915 = vsel %vm1914, %v1913, %v1912
    %v1916 = vrot.slane %v1792, 7
    %v1917 = vsel %vm1896, %v1916, %v1791
    %v1918 = vrot.slane %v1793, 6
    %v1919 = vsel %vm1899, %v1918, %v1917
    %v1920 = vrot.slane %v1794, 5
    %v1921 = vsel %vm1902, %v1920, %v1919
    %v1922 = vrot.slane %v1795, 4
    %v1923 = vsel %vm1905, %v1922, %v1921
    %v1924 = vrot.slane %v1796, 3
    %v1925 = vsel %vm1908, %v1924, %v1923
    %v1926 = vrot.slane %v1797, 2
    %v1927 = vsel %vm1911, %v1926, %v1925
    %v1928 = vrot.slane %v1798, 1
    %v1929 = vsel %vm1914, %v1928, %v1927
    %v1930 = vrot.slane %v1800, 7
    %v1931 = vsel %vm1896, %v1930, %v1799
    %v1932 = vrot.slane %v1801, 6
    %v1933 = vsel %vm1899, %v1932, %v1931
    %v1934 = vrot.slane %v1802, 5
    %v1935 = vsel %vm1902, %v1934, %v1933
    %v1936 = vrot.slane %v1803, 4
    %v1937 = vsel %vm1905, %v1936, %v1935
    %v1938 = vrot.slane %v1804, 3
    %v1939 = vsel %vm1908, %v1938, %v1937
    %v1940 = vrot.slane %v1805, 2
    %v1941 = vsel %vm1911, %v1940, %v1939
    %v1942 = vrot.slane %v1806, 1
    %v1943 = vsel %vm1914, %v1942, %v1941
    %v1944 = vrot.slane %v1808, 7
    %v1945 = vsel %vm1896, %v1944, %v1807
    %v1946 = vrot.slane %v1809, 6
    %v1947 = vsel %vm1899, %v1946, %v1945
    %v1948 = vrot.slane %v1810, 5
    %v1949 = vsel %vm1902, %v1948, %v1947
    %v1950 = vrot.slane %v1811, 4
    %v1951 = vsel %vm1905, %v1950, %v1949
    %v1952 = vrot.slane %v1812, 3
    %v1953 = vsel %vm1908, %v1952, %v1951
    %v1954 = vrot.slane %v1813, 2
    %v1955 = vsel %vm1911, %v1954, %v1953
    %v1956 = vrot.slane %v1814, 1
    %v1957 = vsel %vm1914, %v1956, %v1955
    %v1958 = vrot.slane %v1816, 7
    %v1959 = vsel %vm1896, %v1958, %v1815
    %v1960 = vrot.slane %v1817, 6
    %v1961 = vsel %vm1899, %v1960, %v1959
    %v1962 = vrot.slane %v1818, 5
    %v1963 = vsel %vm1902, %v1962, %v1961
    %v1964 = vrot.slane %v1819, 4
    %v1965 = vsel %vm1905, %v1964, %v1963
    %v1966 = vrot.slane %v1820, 3
    %v1967 = vsel %vm1908, %v1966, %v1965
    %v1968 = vrot.slane %v1821, 2
    %v1969 = vsel %vm1911, %v1968, %v1967
    %v1970 = vrot.slane %v1822, 1
    %v1971 = vsel %vm1914, %v1970, %v1969
    %v1972 = vrot.slane %v1824, 7
    %v1973 = vsel %vm1896, %v1972, %v1823
    %v1974 = vrot.slane %v1825, 6
    %v1975 = vsel %vm1899, %v1974, %v1973
    %v1976 = vrot.slane %v1826, 5
    %v1977 = vsel %vm1902, %v1976, %v1975
    %v1978 = vrot.slane %v1827, 4
    %v1979 = vsel %vm1905, %v1978, %v1977
    %v1980 = vrot.slane %v1828, 3
    %v1981 = vsel %vm1908, %v1980, %v1979
    %v1982 = vrot.slane %v1829, 2
    %v1983 = vsel %vm1911, %v1982, %v1981
    %v1984 = vrot.slane %v1830, 1
    %v1985 = vsel %vm1914, %v1984, %v1983
    %v1986 = vrot.slane %v1832, 7
    %v1987 = vsel %vm1896, %v1986, %v1831
    %v1988 = vrot.slane %v1833, 6
    %v1989 = vsel %vm1899, %v1988, %v1987
    %v1990 = vrot.slane %v1834, 5
    %v1991 = vsel %vm1902, %v1990, %v1989
    %v1992 = vrot.slane %v1835, 4
    %v1993 = vsel %vm1905, %v1992, %v1991
    %v1994 = vrot.slane %v1836, 3
    %v1995 = vsel %vm1908, %v1994, %v1993
    %v1996 = vrot.slane %v1837, 2
    %v1997 = vsel %vm1911, %v1996, %v1995
    %v1998 = vrot.slane %v1838, 1
    %v1999 = vsel %vm1914, %v1998, %v1997
    %2007 = vst [vmem:[#allocation2] sm:$0xff] %v1915
    %2008 = vst [vmem:[#allocation2 + $0x8] sm:$0xff] %v1929
    %2009 = vst [vmem:[#allocation2 + $0x10] sm:$0xff] %v1943
    %2010 = vst [vmem:[#allocation2 + $0x18] sm:$0xff] %v1957
    %2011 = vst [vmem:[#allocation2 + $0x20] sm:$0xff] %v1971
    %2012 = vst [vmem:[#allocation2 + $0x28] sm:$0xff] %v1985
    %2013 = vst [vmem:[#allocation2 + $0x30] sm:$0xff] %v1999
    // Predicated region
    $region22: #{tpu_custom_call.1} parent=1 // pred_check
      _
    $region23: #{tpu_custom_call.1} parent=1 // pred_check_branch
      %2015 = sbr.rel (0) target = $region25
    $region24: #{tpu_custom_call.1} parent=1 // pred_region
      %s2017 = ssub.s32 896, 896
      %2018 = vsyncadd [#allocation3], %s2017
      %s2019 = sshll.u32 [#allocation2], 4
      %s2020 = int_to_ptr.vmem [resolvable:$true] %s2019
      %2025 = dma.vmem_to_hbm [thread:$0]  %s2020, 896, %s5, [#allocation3], 128, 128, 8
    $region25: #{tpu_custom_call.1} parent=1 // pred_fallthru
      _
    // Predicated region
    $region26: #{tpu_custom_call.1} parent=1 // pred_check
      _
    $region27: #{tpu_custom_call.1} parent=1 // pred_check_branch
      %2027 = sbr.rel (0) target = $region29
    $region28: #{tpu_custom_call.1} parent=1 // pred_region
      %2028 = dma.done [#allocation3], 896
    $region29: #{tpu_custom_call.1} parent=1 // pred_fallthru
      _
    %2029 = vsyncpa [#allocation3], 1

</llo_original>
